<compile_context>
chip_gen: v7x
topology: tpu7x:2x2x1
jax: 0.10.0
libtpu: 0.0.40
codegen_flags: <defaults>
</compile_context>

<pallas_src>
import math
import functools

import jax
import jax.numpy as jnp
from jax.experimental import pallas as pl
from jax.experimental.pallas import tpu as pltpu

LN_EPS = 1e-5        # PyTorch nn.LayerNorm default


def _layer_norm(h, w, b):
    # Single-pass LN: mean and E[x^2] computed together; var = E[x^2] - mean^2.
    mu = jnp.mean(h, axis=-1, keepdims=True)
    ms = jnp.mean(h * h, axis=-1, keepdims=True)
    var = jnp.maximum(ms - mu * mu, 0.0)
    return (h - mu) * jax.lax.rsqrt(var + LN_EPS) * w + b


# ---------------------------------------------------------------------------
# Fused kernel: all encoder layers + classifier head.
# Grid = (batch_tiles, layer).  One (TB, S, D) batch tile per step of axis 0.
# ---------------------------------------------------------------------------
def _fused_transformer_kernel(activation_fn, apply_sigmoid, num_heads,
                              x_ref,
                              wqkv_ref, bqkv_ref, wo_ref, bo_ref,
                              ln1w_ref, ln1b_ref,
                              w1_ref, b1_ref, w2_ref, b2_ref,
                              ln2w_ref, ln2b_ref,
                              wfc_ref, bfc_ref,
                              o_ref, act_ref):
    layer = pl.program_id(1)
    n_layers = pl.num_programs(1)

    # Load the batch tile into the resident VMEM scratch on layer 0.
    @pl.when(layer == 0)
    def _():
        act_ref[...] = x_ref[...]                       # (TB, S, D) f32

    x3 = act_ref[...]                                   # (TB, S, D) f32
    TB, S, D = x3.shape
    H = num_heads
    hd = D // H
    scale = 1.0 / math.sqrt(hd)
    x2 = x3.reshape(TB * S, D)

    # ---- fused QKV projection: one lane-dense (TB*S, D) @ (D, 3D) matmul ----
    qkv = jnp.dot(x2.astype(jnp.bfloat16), wqkv_ref[...],
                  preferred_element_type=jnp.float32) + bqkv_ref[...]   # (TB*S, 3D)

    # ---- per-head attention (statically unrolled over H, batched over TB) ---
    # TODO(synk): flash-style KV tiling for long sequences; full (TB,S,S)
    # score tiles are materialized here (fine at small/moderate S).
    o_parts = []
    for h in range(H):
        qh = qkv[:, h * hd:(h + 1) * hd].reshape(TB, S, hd).astype(jnp.bfloat16)
        kh = qkv[:, D + h * hd:D + (h + 1) * hd].reshape(TB, S, hd).astype(jnp.bfloat16)
        vh = qkv[:, 2 * D + h * hd:2 * D + (h + 1) * hd].reshape(TB, S, hd).astype(jnp.bfloat16)

        s = jnp.einsum('bqe,bke->bqk', qh, kh,
                       preferred_element_type=jnp.float32) * scale     # (TB,S,S)
        s = s - jnp.max(s, axis=-1, keepdims=True)
        p = jnp.exp(s)
        p = p * pl.reciprocal(jnp.sum(p, axis=-1, keepdims=True), approx=True)
        oh = jnp.einsum('bqk,bke->bqe', p.astype(jnp.bfloat16), vh,
                        preferred_element_type=jnp.float32)            # (TB,S,hd)
        o_parts.append(oh.reshape(TB * S, hd))

    # Head merge folded into the output projection: one (TB*S,D)@(D,D) matmul.
    o2 = jnp.concatenate(o_parts, axis=-1)                             # (TB*S, D)
    attn = jnp.dot(o2.astype(jnp.bfloat16), wo_ref[...],
                   preferred_element_type=jnp.float32) + bo_ref[...]

    # ---- residual + LayerNorm 1 (f32) ---------------------------------------
    h1 = _layer_norm(x2 + attn, ln1w_ref[...], ln1b_ref[...])

    # ---- feed-forward (ReLU); dropout is identity in eval -------------------
    ff = jnp.dot(h1.astype(jnp.bfloat16), w1_ref[...],
                 preferred_element_type=jnp.float32) + b1_ref[...]
    ff = jnp.maximum(ff, 0.0)
    ff = jnp.dot(ff.astype(jnp.bfloat16), w2_ref[...],
                 preferred_element_type=jnp.float32) + b2_ref[...]

    # ---- residual + LayerNorm 2 (f32) ---------------------------------------
    h2 = _layer_norm(h1 + ff, ln2w_ref[...], ln2b_ref[...])

    act_ref[...] = h2.reshape(TB, S, D)                 # carry to next layer

    # ---- fused classifier head on the last layer step -----------------------
    @pl.when(layer == n_layers - 1)
    def _():
        xm = jnp.mean(h2.reshape(TB, S, D), axis=1)     # mean over seq: (TB, D)
        if activation_fn is not None:
            xm = activation_fn(xm)
        y = jnp.dot(xm.astype(jnp.bfloat16), wfc_ref[...],
                    preferred_element_type=jnp.float32) + bfc_ref[...]  # (TB,Cpad)
        if apply_sigmoid:
            y = 1.0 / (1.0 + jnp.exp(-y))               # exact sigmoid (parity)
        o_ref[...] = y                                  # lane-dense (TB, Cpad)


# ---------------------------------------------------------------------------
# Model: deterministic parameter init + forward (single fused pallas_call)
# ---------------------------------------------------------------------------
class TransformerModelPallas:
    def __init__(self, input_dim, num_heads, hidden_dim, num_layers,
                 num_classes, dropout, activation, loss_type, key):
        # TODO(synk): train-mode dropout (RNG masking) not implemented; eval identity.
        assert input_dim % num_heads == 0
        D, H, HID, L, C = input_dim, num_heads, hidden_dim, num_layers, num_classes
        self.num_heads = H
        self.hidden_dim = HID
        self.num_layers = L
        self.num_classes = C
        self.c_pad = ((C + 127) // 128) * 128            # lane-pad classifier output
        self.activation = activation                     # jnp-compatible callable or None
        self.loss_type = loss_type

        def uni(k, shape, fan_in):
            bound = 1.0 / math.sqrt(fan_in)
            return jax.random.uniform(k, shape, jnp.float32, -bound, bound)

        ki = iter(jax.random.split(key, L * 6 + 2))
        wqkv_l, wo_l, w1_l, b1_l, w2_l, b2_l = [], [], [], [], [], []
        for _ in range(L):
            wqkv = uni(next(ki), (3 * D, D), D)          # in_proj_weight
            wo = uni(next(ki), (D, D), D)                # out_proj.weight
            w1 = uni(next(ki), (HID, D), D)              # linear1
            b1 = uni(next(ki), (1, HID), D)
            w2 = uni(next(ki), (D, HID), HID)            # linear2
            b2 = uni(next(ki), (1, D), HID)
            wqkv_l.append(wqkv.T)                        # (D, 3D), cols = [q|k|v] per head
            wo_l.append(wo.T)                            # (D, D), rows = concat-head index
            w1_l.append(w1.T)                            # (D, HID)
            b1_l.append(b1)
            w2_l.append(w2.T)                            # (HID, D)
            b2_l.append(b2)

        # Stacked (leading L) weights; MXU operands pre-cast to bf16.
        self.wqkv_t = jnp.stack(wqkv_l).astype(jnp.bfloat16)          # (L, D, 3D)
        self.bqkv = jnp.zeros((L, 1, 3 * D), jnp.float32)             # PyTorch init: 0
        self.wo_t = jnp.stack(wo_l).astype(jnp.bfloat16)              # (L, D, D)
        self.bo = jnp.zeros((L, 1, D), jnp.float32)
        self.ln1_w = jnp.ones((L, 1, D), jnp.float32)
        self.ln1_b = jnp.zeros((L, 1, D), jnp.float32)
        self.w1_t = jnp.stack(w1_l).astype(jnp.bfloat16)              # (L, D, HID)
        self.b1 = jnp.stack(b1_l)                                     # (L, 1, HID)
        self.w2_t = jnp.stack(w2_l).astype(jnp.bfloat16)              # (L, HID, D)
        self.b2 = jnp.stack(b2_l)                                     # (L, 1, D)
        self.ln2_w = jnp.ones((L, 1, D), jnp.float32)
        self.ln2_b = jnp.zeros((L, 1, D), jnp.float32)

        wfc = uni(next(ki), (C, D), D)                                # fc
        bfc = uni(next(ki), (1, C), D)
        wfc_pad = jnp.zeros((D, self.c_pad), jnp.float32).at[:, :C].set(wfc.T)
        self.wfc_t = wfc_pad.astype(jnp.bfloat16)                     # bf16 head weights
        self.bfc = jnp.zeros((1, self.c_pad), jnp.float32).at[:, :C].set(bfc)

    @staticmethod
    def _choose_batch_tile(B, S, D):
        # Largest divisor of B whose resident (TB,S,D) f32 activation fits a
        # small budget, while keeping >=2 parallel batch tiles when B >= 2
        # (so both v7x TensorCores get work).
        budget = 4 << 20
        best = 1
        for cand in range(1, B + 1):
            if B % cand:
                continue
            if cand * S * D * 4 > budget:
                continue
            if B >= 2 and B // cand < 2:
                continue
            best = cand
        return best

    @staticmethod
    def _vmem_limit_bytes(TB, S, D, HID, cpad):
        bf, f4 = 2, 4
        w_layer = (D * 3 * D + D * D + D * HID + HID * D) * bf \
            + (3 * D + HID + 6 * D) * f4                     # biases + LN params
        io_blocks = 2 * (TB * S * D * f4) + 2 * (TB * cpad * f4)
        head = 2 * (D * cpad * bf + cpad * f4)
        resident = TB * S * D * f4
        inter = TB * S * (3 * D + 4 * D + HID) * f4 + 2 * TB * S * S * f4
        need = 2 * w_layer + io_blocks + head + resident + 2 * inter
        try:
            cap = pltpu.get_tpu_info().vmem_capacity_bytes   # per-generation budget
        except Exception:
            cap = 64 << 20                                    # conservative (v7x)
        return int(min(max(2 * need, 16 << 20), cap - (4 << 20)))

    def __call__(self, x):
        B, S, D = x.shape
        H, HID, L, cpad = self.num_heads, self.hidden_dim, self.num_layers, self.c_pad
        TB = self._choose_batch_tile(B, S, D)
        nbt = B // TB

        kernel = functools.partial(
            _fused_transformer_kernel,
            self.activation,
            self.loss_type == 'binary_crossentropy',
            H)

        wmap = lambda bt, l: (l, 0, 0)
        cmap = lambda bt, l: (0, 0)

        in_specs = [
            pl.BlockSpec((TB, S, D), lambda bt, l: (bt, 0, 0)),       # x
            pl.BlockSpec((None, D, 3 * D), wmap),                     # wqkv
            pl.BlockSpec((None, 1, 3 * D), wmap),                     # bqkv
            pl.BlockSpec((None, D, D), wmap),                         # wo
            pl.BlockSpec((None, 1, D), wmap),                         # bo
            pl.BlockSpec((None, 1, D), wmap),                         # ln1_w
            pl.BlockSpec((None, 1, D), wmap),                         # ln1_b
            pl.BlockSpec((None, D, HID), wmap),                       # w1
            pl.BlockSpec((None, 1, HID), wmap),                       # b1
            pl.BlockSpec((None, HID, D), wmap),                       # w2
            pl.BlockSpec((None, 1, D), wmap),                         # b2
            pl.BlockSpec((None, 1, D), wmap),                         # ln2_w
            pl.BlockSpec((None, 1, D), wmap),                         # ln2_b
            pl.BlockSpec((D, cpad), cmap),                            # wfc
            pl.BlockSpec((1, cpad), cmap),                            # bfc
        ]
        out_specs = pl.BlockSpec((None, TB, cpad), lambda bt, l: (bt, 0, 0))

        call = pl.pallas_call(
            kernel,
            out_shape=jax.ShapeDtypeStruct((nbt, TB, cpad), jnp.float32),
            grid_spec=pltpu.PrefetchScalarGridSpec(
                num_scalar_prefetch=0,
                grid=(nbt, L),
                in_specs=in_specs,
                out_specs=out_specs,
                scratch_shapes=[pltpu.VMEM((TB, S, D), jnp.float32)]),  # resident act
            compiler_params=pltpu.CompilerParams(
                dimension_semantics=("parallel", "arbitrary"),
                vmem_limit_bytes=self._vmem_limit_bytes(TB, S, D, HID, cpad)),
        )
        out = call(x,
                   self.wqkv_t, self.bqkv, self.wo_t, self.bo,
                   self.ln1_w, self.ln1_b,
                   self.w1_t, self.b1, self.w2_t, self.b2,
                   self.ln2_w, self.ln2_b,
                   self.wfc_t, self.bfc)
        # strip lane padding added for lane-dense stores
        return out.reshape(B, cpad)[:, :self.num_classes]


if __name__ == "__main__":
    key = jax.random.PRNGKey(0)
    kx, kp = jax.random.split(key)

    B, S = 2, 8                       # batch, sequence
    input_dim, num_heads = 32, 4      # d_model, nhead
    hidden_dim, num_layers = 64, 2    # dim_feedforward, layers
    num_classes = 3

    x = jax.random.normal(kx, (B, S, input_dim), jnp.float32)

    model = TransformerModelPallas(
        input_dim=input_dim, num_heads=num_heads, hidden_dim=hidden_dim,
        num_layers=num_layers, num_classes=num_classes, dropout=0.1,
        activation=None, loss_type='binary_crossentropy', key=kp)

    out = model(x)
    jax.block_until_ready(out)
    assert out.shape == (B, num_classes)
    assert bool(jnp.all(jnp.isfinite(out)))
    print("KERNEL_OK")
</pallas_src>

<mosaic_0001>
module attributes {stable_mosaic.version = 11 : i64} {
  func.func @_fused_transformer_kernel(%arg0: i32, %arg1: i32, %arg2: memref<1x8x32xf32, #tpu.memory_space<vmem>>, %arg3: memref<1x32x96xbf16, #tpu.memory_space<vmem>>, %arg4: memref<1x1x96xf32, #tpu.memory_space<vmem>>, %arg5: memref<1x32x32xbf16, #tpu.memory_space<vmem>>, %arg6: memref<1x1x32xf32, #tpu.memory_space<vmem>>, %arg7: memref<1x1x32xf32, #tpu.memory_space<vmem>>, %arg8: memref<1x1x32xf32, #tpu.memory_space<vmem>>, %arg9: memref<1x32x64xbf16, #tpu.memory_space<vmem>>, %arg10: memref<1x1x64xf32, #tpu.memory_space<vmem>>, %arg11: memref<1x64x32xbf16, #tpu.memory_space<vmem>>, %arg12: memref<1x1x32xf32, #tpu.memory_space<vmem>>, %arg13: memref<1x1x32xf32, #tpu.memory_space<vmem>>, %arg14: memref<1x1x32xf32, #tpu.memory_space<vmem>>, %arg15: memref<32x128xbf16, #tpu.memory_space<vmem>>, %arg16: memref<1x128xf32, #tpu.memory_space<vmem>>, %arg17: memref<1x1x128xf32, #tpu.memory_space<vmem>>, %arg18: memref<1x8x32xf32, #tpu.memory_space<vmem>>) attributes {dimension_semantics = [#tpu.dimension_semantics<parallel>, #tpu.dimension_semantics<arbitrary>], iteration_bounds = array<i64: 2, 2>, scalar_prefetch = 0 : i64, scratch_operands = 1 : i64, tpu.core_type = #tpu.core_type<tc>, window_params = [{transform_indices = @transform_0, window_bounds = array<i64: 1, 8, 32>}, {transform_indices = @transform_1, window_bounds = array<i64: 1, 32, 96>}, {transform_indices = @transform_2, window_bounds = array<i64: 1, 1, 96>}, {transform_indices = @transform_3, window_bounds = array<i64: 1, 32, 32>}, {transform_indices = @transform_4, window_bounds = array<i64: 1, 1, 32>}, {transform_indices = @transform_5, window_bounds = array<i64: 1, 1, 32>}, {transform_indices = @transform_6, window_bounds = array<i64: 1, 1, 32>}, {transform_indices = @transform_7, window_bounds = array<i64: 1, 32, 64>}, {transform_indices = @transform_8, window_bounds = array<i64: 1, 1, 64>}, {transform_indices = @transform_9, window_bounds = array<i64: 1, 64, 32>}, {transform_indices = @transform_10, window_bounds = array<i64: 1, 1, 32>}, {transform_indices = @transform_11, window_bounds = array<i64: 1, 1, 32>}, {transform_indices = @transform_12, window_bounds = array<i64: 1, 1, 32>}, {pipeline_mode = #tpu.pipeline_mode<synchronous>, transform_indices = @transform_13, window_bounds = array<i64: 32, 128>}, {pipeline_mode = #tpu.pipeline_mode<synchronous>, transform_indices = @transform_14, window_bounds = array<i64: 1, 128>}, {transform_indices = @transform_15, window_bounds = array<i64: 1, 1, 128>}]} {
    %c0_i32 = arith.constant 0 : i32
    %0 = arith.cmpi eq, %arg1, %c0_i32 : i32
    %1 = arith.extui %0 : i1 to i32
    %c0_i32_0 = arith.constant 0 : i32
    %2 = arith.cmpi ne, %1, %c0_i32_0 : i32
    scf.if %2 {
      %c0_79 = arith.constant 0 : index
      %c0_80 = arith.constant 0 : index
      %c0_81 = arith.constant 0 : index
      %203 = vector.load %arg2[%c0_79, %c0_80, %c0_81] : memref<1x8x32xf32, #tpu.memory_space<vmem>>, vector<1x8x32xf32>
      %c0_82 = arith.constant 0 : index
      %c0_83 = arith.constant 0 : index
      %c0_84 = arith.constant 0 : index
      %204 = vector.load %arg18[%c0_82, %c0_83, %c0_84] : memref<1x8x32xf32, #tpu.memory_space<vmem>>, vector<1x8x32xf32>
      tpu.vector_store %arg18[%c0_82, %c0_83, %c0_84], %203 {strides = array<i32>} : memref<1x8x32xf32, #tpu.memory_space<vmem>>, vector<1x8x32xf32>,
    } else {
    }
    %c0 = arith.constant 0 : index
    %c0_1 = arith.constant 0 : index
    %c0_2 = arith.constant 0 : index
    %3 = vector.load %arg18[%c0, %c0_1, %c0_2] : memref<1x8x32xf32, #tpu.memory_space<vmem>>, vector<1x8x32xf32>
    %4 = vector.shape_cast %3 : vector<1x8x32xf32> to vector<8x32xf32>
    %5 = arith.truncf %4 : vector<8x32xf32> to vector<8x32xbf16>
    %c0_3 = arith.constant 0 : index
    %c0_4 = arith.constant 0 : index
    %c0_5 = arith.constant 0 : index
    %6 = vector.load %arg3[%c0_3, %c0_4, %c0_5] : memref<1x32x96xbf16, #tpu.memory_space<vmem>>, vector<1x32x96xbf16>
    %7 = vector.shape_cast %6 : vector<1x32x96xbf16> to vector<32x96xbf16>
    %cst = arith.constant dense<0.000000e+00> : vector<8x96xf32>
    %8 = tpu.matmul %5, %7, %cst {dimension_numbers = #tpu.dot_dimension_numbers<[1], [0], [0], [1], [0, 0, 1, 1], [], []>} : vector<8x32xbf16>, vector<32x96xbf16>, vector<8x96xf32> -> vector<8x96xf32>
    %c0_6 = arith.constant 0 : index
    %c0_7 = arith.constant 0 : index
    %c0_8 = arith.constant 0 : index
    %9 = vector.load %arg4[%c0_6, %c0_7, %c0_8] : memref<1x1x96xf32, #tpu.memory_space<vmem>>, vector<1x1x96xf32>
    %10 = vector.shape_cast %9 : vector<1x1x96xf32> to vector<1x96xf32>
    %11 = vector.broadcast %10 : vector<1x96xf32> to vector<8x96xf32>
    %12 = arith.addf %8, %11 : vector<8x96xf32>
    %13 = vector.extract_strided_slice %12 {offsets = [0, 0], sizes = [8, 8], strides = [1, 1]} : vector<8x96xf32> to vector<8x8xf32>
    %14 = vector.shape_cast %13 : vector<8x8xf32> to vector<1x8x8xf32>
    %15 = arith.truncf %14 : vector<1x8x8xf32> to vector<1x8x8xbf16>
    %16 = vector.extract_strided_slice %12 {offsets = [0, 32], sizes = [8, 8], strides = [1, 1]} : vector<8x96xf32> to vector<8x8xf32>
    %17 = vector.shape_cast %16 : vector<8x8xf32> to vector<1x8x8xf32>
    %18 = arith.truncf %17 : vector<1x8x8xf32> to vector<1x8x8xbf16>
    %19 = vector.extract_strided_slice %12 {offsets = [0, 64], sizes = [8, 8], strides = [1, 1]} : vector<8x96xf32> to vector<8x8xf32>
    %20 = vector.shape_cast %19 : vector<8x8xf32> to vector<1x8x8xf32>
    %21 = arith.truncf %20 : vector<1x8x8xf32> to vector<1x8x8xbf16>
    "tpu.trace_start"() <{level = 10 : i32, message = "bqe,bke->bqk"}> : () -> ()
    %cst_9 = arith.constant dense<0.000000e+00> : vector<1x8x8xf32>
    %22 = tpu.matmul %15, %18, %cst_9 {dimension_numbers = #tpu.dot_dimension_numbers<[2], [2], [1], [1], [0, 0, 0, 1, 1, 1], [0], [0]>} : vector<1x8x8xbf16>, vector<1x8x8xbf16>, vector<1x8x8xf32> -> vector<1x8x8xf32>
    "tpu.trace_stop"() : () -> ()
    %cst_10 = arith.constant 0.353553385 : f32
    %23 = vector.broadcast %cst_10 : f32 to vector<1x8x8xf32>
    %24 = arith.mulf %22, %23 : vector<1x8x8xf32>
    %cst_11 = arith.constant dense<0xFF800000> : vector<1x8xf32>
    %25 = vector.multi_reduction <maximumf>, %24, %cst_11 [2] : vector<1x8x8xf32> to vector<1x8xf32>
    %26 = vector.shape_cast %25 : vector<1x8xf32> to vector<1x8x1xf32>
    %27 = vector.broadcast %26 : vector<1x8x1xf32> to vector<1x8x8xf32>
    %28 = arith.subf %24, %27 : vector<1x8x8xf32>
    %29 = math.exp %28 : vector<1x8x8xf32>
    %cst_12 = arith.constant dense<0.000000e+00> : vector<1x8xf32>
    %30 = vector.multi_reduction <add>, %29, %cst_12 [2] : vector<1x8x8xf32> to vector<1x8xf32>
    %31 = vector.shape_cast %30 : vector<1x8xf32> to vector<1x8x1xf32>
    %32 = tpu.reciprocal %31 {approx = true} : vector<1x8x1xf32> -> vector<1x8x1xf32>
    %33 = vector.broadcast %32 : vector<1x8x1xf32> to vector<1x8x8xf32>
    %34 = arith.mulf %29, %33 : vector<1x8x8xf32>
    %35 = arith.truncf %34 : vector<1x8x8xf32> to vector<1x8x8xbf16>
    "tpu.trace_start"() <{level = 10 : i32, message = "bqk,bke->bqe"}> : () -> ()
    %cst_13 = arith.constant dense<0.000000e+00> : vector<1x8x8xf32>
    %36 = tpu.matmul %35, %21, %cst_13 {dimension_numbers = #tpu.dot_dimension_numbers<[2], [1], [1], [2], [0, 0, 0, 1, 1, 2], [0], [0]>} : vector<1x8x8xbf16>, vector<1x8x8xbf16>, vector<1x8x8xf32> -> vector<1x8x8xf32>
    "tpu.trace_stop"() : () -> ()
    %37 = vector.shape_cast %36 : vector<1x8x8xf32> to vector<8x8xf32>
    %38 = vector.extract_strided_slice %12 {offsets = [0, 8], sizes = [8, 8], strides = [1, 1]} : vector<8x96xf32> to vector<8x8xf32>
    %39 = vector.shape_cast %38 : vector<8x8xf32> to vector<1x8x8xf32>
    %40 = arith.truncf %39 : vector<1x8x8xf32> to vector<1x8x8xbf16>
    %41 = vector.extract_strided_slice %12 {offsets = [0, 40], sizes = [8, 8], strides = [1, 1]} : vector<8x96xf32> to vector<8x8xf32>
    %42 = vector.shape_cast %41 : vector<8x8xf32> to vector<1x8x8xf32>
    %43 = arith.truncf %42 : vector<1x8x8xf32> to vector<1x8x8xbf16>
    %44 = vector.extract_strided_slice %12 {offsets = [0, 72], sizes = [8, 8], strides = [1, 1]} : vector<8x96xf32> to vector<8x8xf32>
    %45 = vector.shape_cast %44 : vector<8x8xf32> to vector<1x8x8xf32>
    %46 = arith.truncf %45 : vector<1x8x8xf32> to vector<1x8x8xbf16>
    "tpu.trace_start"() <{level = 10 : i32, message = "bqe,bke->bqk"}> : () -> ()
    %cst_14 = arith.constant dense<0.000000e+00> : vector<1x8x8xf32>
    %47 = tpu.matmul %40, %43, %cst_14 {dimension_numbers = #tpu.dot_dimension_numbers<[2], [2], [1], [1], [0, 0, 0, 1, 1, 1], [0], [0]>} : vector<1x8x8xbf16>, vector<1x8x8xbf16>, vector<1x8x8xf32> -> vector<1x8x8xf32>
    "tpu.trace_stop"() : () -> ()
    %cst_15 = arith.constant 0.353553385 : f32
    %48 = vector.broadcast %cst_15 : f32 to vector<1x8x8xf32>
    %49 = arith.mulf %47, %48 : vector<1x8x8xf32>
    %cst_16 = arith.constant dense<0xFF800000> : vector<1x8xf32>
    %50 = vector.multi_reduction <maximumf>, %49, %cst_16 [2] : vector<1x8x8xf32> to vector<1x8xf32>
    %51 = vector.shape_cast %50 : vector<1x8xf32> to vector<1x8x1xf32>
    %52 = vector.broadcast %51 : vector<1x8x1xf32> to vector<1x8x8xf32>
    %53 = arith.subf %49, %52 : vector<1x8x8xf32>
    %54 = math.exp %53 : vector<1x8x8xf32>
    %cst_17 = arith.constant dense<0.000000e+00> : vector<1x8xf32>
    %55 = vector.multi_reduction <add>, %54, %cst_17 [2] : vector<1x8x8xf32> to vector<1x8xf32>
    %56 = vector.shape_cast %55 : vector<1x8xf32> to vector<1x8x1xf32>
    %57 = tpu.reciprocal %56 {approx = true} : vector<1x8x1xf32> -> vector<1x8x1xf32>
    %58 = vector.broadcast %57 : vector<1x8x1xf32> to vector<1x8x8xf32>
    %59 = arith.mulf %54, %58 : vector<1x8x8xf32>
    %60 = arith.truncf %59 : vector<1x8x8xf32> to vector<1x8x8xbf16>
    "tpu.trace_start"() <{level = 10 : i32, message = "bqk,bke->bqe"}> : () -> ()
    %cst_18 = arith.constant dense<0.000000e+00> : vector<1x8x8xf32>
    %61 = tpu.matmul %60, %46, %cst_18 {dimension_numbers = #tpu.dot_dimension_numbers<[2], [1], [1], [2], [0, 0, 0, 1, 1, 2], [0], [0]>} : vector<1x8x8xbf16>, vector<1x8x8xbf16>, vector<1x8x8xf32> -> vector<1x8x8xf32>
    "tpu.trace_stop"() : () -> ()
    %62 = vector.shape_cast %61 : vector<1x8x8xf32> to vector<8x8xf32>
    %63 = vector.extract_strided_slice %12 {offsets = [0, 16], sizes = [8, 8], strides = [1, 1]} : vector<8x96xf32> to vector<8x8xf32>
    %64 = vector.shape_cast %63 : vector<8x8xf32> to vector<1x8x8xf32>
    %65 = arith.truncf %64 : vector<1x8x8xf32> to vector<1x8x8xbf16>
    %66 = vector.extract_strided_slice %12 {offsets = [0, 48], sizes = [8, 8], strides = [1, 1]} : vector<8x96xf32> to vector<8x8xf32>
    %67 = vector.shape_cast %66 : vector<8x8xf32> to vector<1x8x8xf32>
    %68 = arith.truncf %67 : vector<1x8x8xf32> to vector<1x8x8xbf16>
    %69 = vector.extract_strided_slice %12 {offsets = [0, 80], sizes = [8, 8], strides = [1, 1]} : vector<8x96xf32> to vector<8x8xf32>
    %70 = vector.shape_cast %69 : vector<8x8xf32> to vector<1x8x8xf32>
    %71 = arith.truncf %70 : vector<1x8x8xf32> to vector<1x8x8xbf16>
    "tpu.trace_start"() <{level = 10 : i32, message = "bqe,bke->bqk"}> : () -> ()
    %cst_19 = arith.constant dense<0.000000e+00> : vector<1x8x8xf32>
    %72 = tpu.matmul %65, %68, %cst_19 {dimension_numbers = #tpu.dot_dimension_numbers<[2], [2], [1], [1], [0, 0, 0, 1, 1, 1], [0], [0]>} : vector<1x8x8xbf16>, vector<1x8x8xbf16>, vector<1x8x8xf32> -> vector<1x8x8xf32>
    "tpu.trace_stop"() : () -> ()
    %cst_20 = arith.constant 0.353553385 : f32
    %73 = vector.broadcast %cst_20 : f32 to vector<1x8x8xf32>
    %74 = arith.mulf %72, %73 : vector<1x8x8xf32>
    %cst_21 = arith.constant dense<0xFF800000> : vector<1x8xf32>
    %75 = vector.multi_reduction <maximumf>, %74, %cst_21 [2] : vector<1x8x8xf32> to vector<1x8xf32>
    %76 = vector.shape_cast %75 : vector<1x8xf32> to vector<1x8x1xf32>
    %77 = vector.broadcast %76 : vector<1x8x1xf32> to vector<1x8x8xf32>
    %78 = arith.subf %74, %77 : vector<1x8x8xf32>
    %79 = math.exp %78 : vector<1x8x8xf32>
    %cst_22 = arith.constant dense<0.000000e+00> : vector<1x8xf32>
    %80 = vector.multi_reduction <add>, %79, %cst_22 [2] : vector<1x8x8xf32> to vector<1x8xf32>
    %81 = vector.shape_cast %80 : vector<1x8xf32> to vector<1x8x1xf32>
    %82 = tpu.reciprocal %81 {approx = true} : vector<1x8x1xf32> -> vector<1x8x1xf32>
    %83 = vector.broadcast %82 : vector<1x8x1xf32> to vector<1x8x8xf32>
    %84 = arith.mulf %79, %83 : vector<1x8x8xf32>
    %85 = arith.truncf %84 : vector<1x8x8xf32> to vector<1x8x8xbf16>
    "tpu.trace_start"() <{level = 10 : i32, message = "bqk,bke->bqe"}> : () -> ()
    %cst_23 = arith.constant dense<0.000000e+00> : vector<1x8x8xf32>
    %86 = tpu.matmul %85, %71, %cst_23 {dimension_numbers = #tpu.dot_dimension_numbers<[2], [1], [1], [2], [0, 0, 0, 1, 1, 2], [0], [0]>} : vector<1x8x8xbf16>, vector<1x8x8xbf16>, vector<1x8x8xf32> -> vector<1x8x8xf32>
    "tpu.trace_stop"() : () -> ()
    %87 = vector.shape_cast %86 : vector<1x8x8xf32> to vector<8x8xf32>
    %88 = vector.extract_strided_slice %12 {offsets = [0, 24], sizes = [8, 8], strides = [1, 1]} : vector<8x96xf32> to vector<8x8xf32>
    %89 = vector.shape_cast %88 : vector<8x8xf32> to vector<1x8x8xf32>
    %90 = arith.truncf %89 : vector<1x8x8xf32> to vector<1x8x8xbf16>
    %91 = vector.extract_strided_slice %12 {offsets = [0, 56], sizes = [8, 8], strides = [1, 1]} : vector<8x96xf32> to vector<8x8xf32>
    %92 = vector.shape_cast %91 : vector<8x8xf32> to vector<1x8x8xf32>
    %93 = arith.truncf %92 : vector<1x8x8xf32> to vector<1x8x8xbf16>
    %94 = vector.extract_strided_slice %12 {offsets = [0, 88], sizes = [8, 8], strides = [1, 1]} : vector<8x96xf32> to vector<8x8xf32>
    %95 = vector.shape_cast %94 : vector<8x8xf32> to vector<1x8x8xf32>
    %96 = arith.truncf %95 : vector<1x8x8xf32> to vector<1x8x8xbf16>
    "tpu.trace_start"() <{level = 10 : i32, message = "bqe,bke->bqk"}> : () -> ()
    %cst_24 = arith.constant dense<0.000000e+00> : vector<1x8x8xf32>
    %97 = tpu.matmul %90, %93, %cst_24 {dimension_numbers = #tpu.dot_dimension_numbers<[2], [2], [1], [1], [0, 0, 0, 1, 1, 1], [0], [0]>} : vector<1x8x8xbf16>, vector<1x8x8xbf16>, vector<1x8x8xf32> -> vector<1x8x8xf32>
    "tpu.trace_stop"() : () -> ()
    %cst_25 = arith.constant 0.353553385 : f32
    %98 = vector.broadcast %cst_25 : f32 to vector<1x8x8xf32>
    %99 = arith.mulf %97, %98 : vector<1x8x8xf32>
    %cst_26 = arith.constant dense<0xFF800000> : vector<1x8xf32>
    %100 = vector.multi_reduction <maximumf>, %99, %cst_26 [2] : vector<1x8x8xf32> to vector<1x8xf32>
    %101 = vector.shape_cast %100 : vector<1x8xf32> to vector<1x8x1xf32>
    %102 = vector.broadcast %101 : vector<1x8x1xf32> to vector<1x8x8xf32>
    %103 = arith.subf %99, %102 : vector<1x8x8xf32>
    %104 = math.exp %103 : vector<1x8x8xf32>
    %cst_27 = arith.constant dense<0.000000e+00> : vector<1x8xf32>
    %105 = vector.multi_reduction <add>, %104, %cst_27 [2] : vector<1x8x8xf32> to vector<1x8xf32>
    %106 = vector.shape_cast %105 : vector<1x8xf32> to vector<1x8x1xf32>
    %107 = tpu.reciprocal %106 {approx = true} : vector<1x8x1xf32> -> vector<1x8x1xf32>
    %108 = vector.broadcast %107 : vector<1x8x1xf32> to vector<1x8x8xf32>
    %109 = arith.mulf %104, %108 : vector<1x8x8xf32>
    %110 = arith.truncf %109 : vector<1x8x8xf32> to vector<1x8x8xbf16>
    "tpu.trace_start"() <{level = 10 : i32, message = "bqk,bke->bqe"}> : () -> ()
    %cst_28 = arith.constant dense<0.000000e+00> : vector<1x8x8xf32>
    %111 = tpu.matmul %110, %96, %cst_28 {dimension_numbers = #tpu.dot_dimension_numbers<[2], [1], [1], [2], [0, 0, 0, 1, 1, 2], [0], [0]>} : vector<1x8x8xbf16>, vector<1x8x8xbf16>, vector<1x8x8xf32> -> vector<1x8x8xf32>
    "tpu.trace_stop"() : () -> ()
    %112 = vector.shape_cast %111 : vector<1x8x8xf32> to vector<8x8xf32>
    %113 = tpu.concatenate %37, %62, %87, %112 in 1 : vector<8x8xf32>, vector<8x8xf32>, vector<8x8xf32>, vector<8x8xf32> -> vector<8x32xf32>
    %114 = arith.truncf %113 : vector<8x32xf32> to vector<8x32xbf16>
    %c0_29 = arith.constant 0 : index
    %c0_30 = arith.constant 0 : index
    %c0_31 = arith.constant 0 : index
    %115 = vector.load %arg5[%c0_29, %c0_30, %c0_31] : memref<1x32x32xbf16, #tpu.memory_space<vmem>>, vector<1x32x32xbf16>
    %116 = vector.shape_cast %115 : vector<1x32x32xbf16> to vector<32x32xbf16>
    %cst_32 = arith.constant dense<0.000000e+00> : vector<8x32xf32>
    %117 = tpu.matmul %114, %116, %cst_32 {dimension_numbers = #tpu.dot_dimension_numbers<[1], [0], [0], [1], [0, 0, 1, 1], [], []>} : vector<8x32xbf16>, vector<32x32xbf16>, vector<8x32xf32> -> vector<8x32xf32>
    %c0_33 = arith.constant 0 : index
    %c0_34 = arith.constant 0 : index
    %c0_35 = arith.constant 0 : index
    %118 = vector.load %arg6[%c0_33, %c0_34, %c0_35] : memref<1x1x32xf32, #tpu.memory_space<vmem>>, vector<1x1x32xf32>
    %119 = vector.shape_cast %118 : vector<1x1x32xf32> to vector<1x32xf32>
    %120 = vector.broadcast %119 : vector<1x32xf32> to vector<8x32xf32>
    %121 = arith.addf %117, %120 : vector<8x32xf32>
    %122 = arith.addf %4, %121 : vector<8x32xf32>
    %c0_36 = arith.constant 0 : index
    %c0_37 = arith.constant 0 : index
    %c0_38 = arith.constant 0 : index
    %123 = vector.load %arg7[%c0_36, %c0_37, %c0_38] : memref<1x1x32xf32, #tpu.memory_space<vmem>>, vector<1x1x32xf32>
    %124 = vector.shape_cast %123 : vector<1x1x32xf32> to vector<1x32xf32>
    %c0_39 = arith.constant 0 : index
    %c0_40 = arith.constant 0 : index
    %c0_41 = arith.constant 0 : index
    %125 = vector.load %arg8[%c0_39, %c0_40, %c0_41] : memref<1x1x32xf32, #tpu.memory_space<vmem>>, vector<1x1x32xf32>
    %126 = vector.shape_cast %125 : vector<1x1x32xf32> to vector<1x32xf32>
    %cst_42 = arith.constant dense<0.000000e+00> : vector<8xf32>
    %127 = vector.multi_reduction <add>, %122, %cst_42 [1] : vector<8x32xf32> to vector<8xf32>
    %128 = vector.shape_cast %127 : vector<8xf32> to vector<8x1xf32>
    %cst_43 = arith.constant 3.200000e+01 : f32
    %129 = vector.broadcast %cst_43 : f32 to vector<8x1xf32>
    %130 = arith.divf %128, %129 : vector<8x1xf32>
    %131 = arith.mulf %122, %122 : vector<8x32xf32>
    %cst_44 = arith.constant dense<0.000000e+00> : vector<8xf32>
    %132 = vector.multi_reduction <add>, %131, %cst_44 [1] : vector<8x32xf32> to vector<8xf32>
    %133 = vector.shape_cast %132 : vector<8xf32> to vector<8x1xf32>
    %cst_45 = arith.constant 3.200000e+01 : f32
    %134 = vector.broadcast %cst_45 : f32 to vector<8x1xf32>
    %135 = arith.divf %133, %134 : vector<8x1xf32>
    %136 = arith.mulf %130, %130 : vector<8x1xf32>
    %137 = arith.subf %135, %136 : vector<8x1xf32>
    %cst_46 = arith.constant 0.000000e+00 : f32
    %138 = vector.broadcast %cst_46 : f32 to vector<8x1xf32>
    %139 = arith.maximumf %137, %138 : vector<8x1xf32>
    %140 = vector.broadcast %130 : vector<8x1xf32> to vector<8x32xf32>
    %141 = arith.subf %122, %140 : vector<8x32xf32>
    %cst_47 = arith.constant 9.99999974E-6 : f32
    %142 = vector.broadcast %cst_47 : f32 to vector<8x1xf32>
    %143 = arith.addf %139, %142 : vector<8x1xf32>
    %144 = math.rsqrt %143 : vector<8x1xf32>
    %145 = vector.broadcast %144 : vector<8x1xf32> to vector<8x32xf32>
    %146 = arith.mulf %141, %145 : vector<8x32xf32>
    %147 = vector.broadcast %124 : vector<1x32xf32> to vector<8x32xf32>
    %148 = arith.mulf %146, %147 : vector<8x32xf32>
    %149 = vector.broadcast %126 : vector<1x32xf32> to vector<8x32xf32>
    %150 = arith.addf %148, %149 : vector<8x32xf32>
    %151 = arith.truncf %150 : vector<8x32xf32> to vector<8x32xbf16>
    %c0_48 = arith.constant 0 : index
    %c0_49 = arith.constant 0 : index
    %c0_50 = arith.constant 0 : index
    %152 = vector.load %arg9[%c0_48, %c0_49, %c0_50] : memref<1x32x64xbf16, #tpu.memory_space<vmem>>, vector<1x32x64xbf16>
    %153 = vector.shape_cast %152 : vector<1x32x64xbf16> to vector<32x64xbf16>
    %cst_51 = arith.constant dense<0.000000e+00> : vector<8x64xf32>
    %154 = tpu.matmul %151, %153, %cst_51 {dimension_numbers = #tpu.dot_dimension_numbers<[1], [0], [0], [1], [0, 0, 1, 1], [], []>} : vector<8x32xbf16>, vector<32x64xbf16>, vector<8x64xf32> -> vector<8x64xf32>
    %c0_52 = arith.constant 0 : index
    %c0_53 = arith.constant 0 : index
    %c0_54 = arith.constant 0 : index
    %155 = vector.load %arg10[%c0_52, %c0_53, %c0_54] : memref<1x1x64xf32, #tpu.memory_space<vmem>>, vector<1x1x64xf32>
    %156 = vector.shape_cast %155 : vector<1x1x64xf32> to vector<1x64xf32>
    %157 = vector.broadcast %156 : vector<1x64xf32> to vector<8x64xf32>
    %158 = arith.addf %154, %157 : vector<8x64xf32>
    %cst_55 = arith.constant 0.000000e+00 : f32
    %159 = vector.broadcast %cst_55 : f32 to vector<8x64xf32>
    %160 = arith.maximumf %158, %159 : vector<8x64xf32>
    %161 = arith.truncf %160 : vector<8x64xf32> to vector<8x64xbf16>
    %c0_56 = arith.constant 0 : index
    %c0_57 = arith.constant 0 : index
    %c0_58 = arith.constant 0 : index
    %162 = vector.load %arg11[%c0_56, %c0_57, %c0_58] : memref<1x64x32xbf16, #tpu.memory_space<vmem>>, vector<1x64x32xbf16>
    %163 = vector.shape_cast %162 : vector<1x64x32xbf16> to vector<64x32xbf16>
    %cst_59 = arith.constant dense<0.000000e+00> : vector<8x32xf32>
    %164 = tpu.matmul %161, %163, %cst_59 {dimension_numbers = #tpu.dot_dimension_numbers<[1], [0], [0], [1], [0, 0, 1, 1], [], []>} : vector<8x64xbf16>, vector<64x32xbf16>, vector<8x32xf32> -> vector<8x32xf32>
    %c0_60 = arith.constant 0 : index
    %c0_61 = arith.constant 0 : index
    %c0_62 = arith.constant 0 : index
    %165 = vector.load %arg12[%c0_60, %c0_61, %c0_62] : memref<1x1x32xf32, #tpu.memory_space<vmem>>, vector<1x1x32xf32>
    %166 = vector.shape_cast %165 : vector<1x1x32xf32> to vector<1x32xf32>
    %167 = vector.broadcast %166 : vector<1x32xf32> to vector<8x32xf32>
    %168 = arith.addf %164, %167 : vector<8x32xf32>
    %169 = arith.addf %150, %168 : vector<8x32xf32>
    %c0_63 = arith.constant 0 : index
    %c0_64 = arith.constant 0 : index
    %c0_65 = arith.constant 0 : index
    %170 = vector.load %arg13[%c0_63, %c0_64, %c0_65] : memref<1x1x32xf32, #tpu.memory_space<vmem>>, vector<1x1x32xf32>
    %171 = vector.shape_cast %170 : vector<1x1x32xf32> to vector<1x32xf32>
    %c0_66 = arith.constant 0 : index
    %c0_67 = arith.constant 0 : index
    %c0_68 = arith.constant 0 : index
    %172 = vector.load %arg14[%c0_66, %c0_67, %c0_68] : memref<1x1x32xf32, #tpu.memory_space<vmem>>, vector<1x1x32xf32>
    %173 = vector.shape_cast %172 : vector<1x1x32xf32> to vector<1x32xf32>
    %cst_69 = arith.constant dense<0.000000e+00> : vector<8xf32>
    %174 = vector.multi_reduction <add>, %169, %cst_69 [1] : vector<8x32xf32> to vector<8xf32>
    %175 = vector.shape_cast %174 : vector<8xf32> to vector<8x1xf32>
    %cst_70 = arith.constant 3.200000e+01 : f32
    %176 = vector.broadcast %cst_70 : f32 to vector<8x1xf32>
    %177 = arith.divf %175, %176 : vector<8x1xf32>
    %178 = arith.mulf %169, %169 : vector<8x32xf32>
    %cst_71 = arith.constant dense<0.000000e+00> : vector<8xf32>
    %179 = vector.multi_reduction <add>, %178, %cst_71 [1] : vector<8x32xf32> to vector<8xf32>
    %180 = vector.shape_cast %179 : vector<8xf32> to vector<8x1xf32>
    %cst_72 = arith.constant 3.200000e+01 : f32
    %181 = vector.broadcast %cst_72 : f32 to vector<8x1xf32>
    %182 = arith.divf %180, %181 : vector<8x1xf32>
    %183 = arith.mulf %177, %177 : vector<8x1xf32>
    %184 = arith.subf %182, %183 : vector<8x1xf32>
    %cst_73 = arith.constant 0.000000e+00 : f32
    %185 = vector.broadcast %cst_73 : f32 to vector<8x1xf32>
    %186 = arith.maximumf %184, %185 : vector<8x1xf32>
    %187 = vector.broadcast %177 : vector<8x1xf32> to vector<8x32xf32>
    %188 = arith.subf %169, %187 : vector<8x32xf32>
    %cst_74 = arith.constant 9.99999974E-6 : f32
    %189 = vector.broadcast %cst_74 : f32 to vector<8x1xf32>
    %190 = arith.addf %186, %189 : vector<8x1xf32>
    %191 = math.rsqrt %190 : vector<8x1xf32>
    %192 = vector.broadcast %191 : vector<8x1xf32> to vector<8x32xf32>
    %193 = arith.mulf %188, %192 : vector<8x32xf32>
    %194 = vector.broadcast %171 : vector<1x32xf32> to vector<8x32xf32>
    %195 = arith.mulf %193, %194 : vector<8x32xf32>
    %196 = vector.broadcast %173 : vector<1x32xf32> to vector<8x32xf32>
    %197 = arith.addf %195, %196 : vector<8x32xf32>
    %198 = vector.shape_cast %197 : vector<8x32xf32> to vector<1x8x32xf32>
    %c0_75 = arith.constant 0 : index
    %c0_76 = arith.constant 0 : index
    %c0_77 = arith.constant 0 : index
    %199 = vector.load %arg18[%c0_75, %c0_76, %c0_77] : memref<1x8x32xf32, #tpu.memory_space<vmem>>, vector<1x8x32xf32>
    tpu.vector_store %arg18[%c0_75, %c0_76, %c0_77], %198 {strides = array<i32>} : memref<1x8x32xf32, #tpu.memory_space<vmem>>, vector<1x8x32xf32>,
    %c1_i32 = arith.constant 1 : i32
    %200 = arith.cmpi eq, %arg1, %c1_i32 : i32
    %201 = arith.extui %200 : i1 to i32
    %c0_i32_78 = arith.constant 0 : i32
    %202 = arith.cmpi ne, %201, %c0_i32_78 : i32
    scf.if %202 {
      %203 = vector.shape_cast %197 : vector<8x32xf32> to vector<1x8x32xf32>
      %cst_79 = arith.constant dense<0.000000e+00> : vector<1x32xf32>
      %204 = vector.multi_reduction <add>, %203, %cst_79 [1] : vector<1x8x32xf32> to vector<1x32xf32>
      %cst_80 = arith.constant 8.000000e+00 : f32
      %205 = vector.broadcast %cst_80 : f32 to vector<1x32xf32>
      %206 = arith.divf %204, %205 : vector<1x32xf32>
      %207 = arith.truncf %206 : vector<1x32xf32> to vector<1x32xbf16>
      %c0_81 = arith.constant 0 : index
      %c0_82 = arith.constant 0 : index
      %208 = vector.load %arg15[%c0_81, %c0_82] : memref<32x128xbf16, #tpu.memory_space<vmem>>, vector<32x128xbf16>
      %cst_83 = arith.constant dense<0.000000e+00> : vector<1x128xf32>
      %209 = tpu.matmul %207, %208, %cst_83 {dimension_numbers = #tpu.dot_dimension_numbers<[1], [0], [0], [1], [0, 0, 1, 1], [], []>} : vector<1x32xbf16>, vector<32x128xbf16>, vector<1x128xf32> -> vector<1x128xf32>
      %c0_84 = arith.constant 0 : index
      %c0_85 = arith.constant 0 : index
      %210 = vector.load %arg16[%c0_84, %c0_85] : memref<1x128xf32, #tpu.memory_space<vmem>>, vector<1x128xf32>
      %211 = arith.addf %209, %210 : vector<1x128xf32>
      %cst_86 = arith.constant 0.000000e+00 : f32
      %212 = vector.broadcast %cst_86 : f32 to vector<1x128xf32>
      %213 = arith.subf %212, %211 : vector<1x128xf32>
      %214 = math.exp %213 : vector<1x128xf32>
      %cst_87 = arith.constant 1.000000e+00 : f32
      %215 = vector.broadcast %cst_87 : f32 to vector<1x128xf32>
      %216 = arith.addf %215, %214 : vector<1x128xf32>
      %cst_88 = arith.constant 1.000000e+00 : f32
      %217 = vector.broadcast %cst_88 : f32 to vector<1x128xf32>
      %218 = arith.divf %217, %216 : vector<1x128xf32>
      %c0_89 = arith.constant 0 : index
      %c0_90 = arith.constant 0 : index
      %c0_91 = arith.constant 0 : index
      %219 = vector.load %arg17[%c0_89, %c0_90, %c0_91] : memref<1x1x128xf32, #tpu.memory_space<vmem>>, vector<1x1x128xf32>
      %220 = vector.shape_cast %219 : vector<1x1x128xf32> to vector<1x128xf32>
      %221 = vector.shape_cast %218 : vector<1x128xf32> to vector<1x1x128xf32>
      tpu.vector_store %arg17[%c0_89, %c0_90, %c0_91], %221 {strides = array<i32>} : memref<1x1x128xf32, #tpu.memory_space<vmem>>, vector<1x1x128xf32>,
    } else {
    }
    return
  }
  func.func @transform_0(%arg0: i32, %arg1: i32) -> (i32, i32, i32) {
    %c0_i32 = arith.constant 0 : i32
    %c0_i32_0 = arith.constant 0 : i32
    %c0_i32_1 = arith.constant 0 : i32
    return %arg0, %c0_i32, %c0_i32_0 : i32, i32, i32
  }
  func.func @transform_1(%arg0: i32, %arg1: i32) -> (i32, i32, i32) {
    %c0_i32 = arith.constant 0 : i32
    %c0_i32_0 = arith.constant 0 : i32
    %c0_i32_1 = arith.constant 0 : i32
    return %arg1, %c0_i32, %c0_i32_0 : i32, i32, i32
  }
  func.func @transform_2(%arg0: i32, %arg1: i32) -> (i32, i32, i32) {
    %c0_i32 = arith.constant 0 : i32
    %c0_i32_0 = arith.constant 0 : i32
    %c0_i32_1 = arith.constant 0 : i32
    return %arg1, %c0_i32, %c0_i32_0 : i32, i32, i32
  }
  func.func @transform_3(%arg0: i32, %arg1: i32) -> (i32, i32, i32) {
    %c0_i32 = arith.constant 0 : i32
    %c0_i32_0 = arith.constant 0 : i32
    %c0_i32_1 = arith.constant 0 : i32
    return %arg1, %c0_i32, %c0_i32_0 : i32, i32, i32
  }
  func.func @transform_4(%arg0: i32, %arg1: i32) -> (i32, i32, i32) {
    %c0_i32 = arith.constant 0 : i32
    %c0_i32_0 = arith.constant 0 : i32
    %c0_i32_1 = arith.constant 0 : i32
    return %arg1, %c0_i32, %c0_i32_0 : i32, i32, i32
  }
  func.func @transform_5(%arg0: i32, %arg1: i32) -> (i32, i32, i32) {
    %c0_i32 = arith.constant 0 : i32
    %c0_i32_0 = arith.constant 0 : i32
    %c0_i32_1 = arith.constant 0 : i32
    return %arg1, %c0_i32, %c0_i32_0 : i32, i32, i32
  }
  func.func @transform_6(%arg0: i32, %arg1: i32) -> (i32, i32, i32) {
    %c0_i32 = arith.constant 0 : i32
    %c0_i32_0 = arith.constant 0 : i32
    %c0_i32_1 = arith.constant 0 : i32
    return %arg1, %c0_i32, %c0_i32_0 : i32, i32, i32
  }
  func.func @transform_7(%arg0: i32, %arg1: i32) -> (i32, i32, i32) {
    %c0_i32 = arith.constant 0 : i32
    %c0_i32_0 = arith.constant 0 : i32
    %c0_i32_1 = arith.constant 0 : i32
    return %arg1, %c0_i32, %c0_i32_0 : i32, i32, i32
  }
  func.func @transform_8(%arg0: i32, %arg1: i32) -> (i32, i32, i32) {
    %c0_i32 = arith.constant 0 : i32
    %c0_i32_0 = arith.constant 0 : i32
    %c0_i32_1 = arith.constant 0 : i32
    return %arg1, %c0_i32, %c0_i32_0 : i32, i32, i32
  }
  func.func @transform_9(%arg0: i32, %arg1: i32) -> (i32, i32, i32) {
    %c0_i32 = arith.constant 0 : i32
    %c0_i32_0 = arith.constant 0 : i32
    %c0_i32_1 = arith.constant 0 : i32
    return %arg1, %c0_i32, %c0_i32_0 : i32, i32, i32
  }
  func.func @transform_10(%arg0: i32, %arg1: i32) -> (i32, i32, i32) {
    %c0_i32 = arith.constant 0 : i32
    %c0_i32_0 = arith.constant 0 : i32
    %c0_i32_1 = arith.constant 0 : i32
    return %arg1, %c0_i32, %c0_i32_0 : i32, i32, i32
  }
  func.func @transform_11(%arg0: i32, %arg1: i32) -> (i32, i32, i32) {
    %c0_i32 = arith.constant 0 : i32
    %c0_i32_0 = arith.constant 0 : i32
    %c0_i32_1 = arith.constant 0 : i32
    return %arg1, %c0_i32, %c0_i32_0 : i32, i32, i32
  }
  func.func @transform_12(%arg0: i32, %arg1: i32) -> (i32, i32, i32) {
    %c0_i32 = arith.constant 0 : i32
    %c0_i32_0 = arith.constant 0 : i32
    %c0_i32_1 = arith.constant 0 : i32
    return %arg1, %c0_i32, %c0_i32_0 : i32, i32, i32
  }
  func.func @transform_13(%arg0: i32, %arg1: i32) -> (i32, i32) {
    %c0_i32 = arith.constant 0 : i32
    %c0_i32_0 = arith.constant 0 : i32
    %c0_i32_1 = arith.constant 0 : i32
    return %c0_i32, %c0_i32_0 : i32, i32
  }
  func.func @transform_14(%arg0: i32, %arg1: i32) -> (i32, i32) {
    %c0_i32 = arith.constant 0 : i32
    %c0_i32_0 = arith.constant 0 : i32
    %c0_i32_1 = arith.constant 0 : i32
    return %c0_i32, %c0_i32_0 : i32, i32
  }
  func.func @transform_15(%arg0: i32, %arg1: i32) -> (i32, i32, i32) {
    %c0_i32 = arith.constant 0 : i32
    %c0_i32_0 = arith.constant 0 : i32
    %c0_i32_1 = arith.constant 0 : i32
    return %arg0, %c0_i32, %c0_i32_0 : i32, i32, i32
  }
}

</mosaic_0001>

<llo_original>
// kernel: tpu_custom_call.1
$region0: #{tpu_custom_call.1}
  #allocation0 [shape = 'u32[]', space=smem, size = 0x4, offset = 0x4, fixed_abs, tag = 'smem constant byte address 0x4 - core index']
  #allocation1 [shape = 'u32[144,128]{1,0:T(1,128)}', space=vmem, size = 0x12000, scoped, tag = 'internal scratch']
  #allocation2 [shape = 'f32[1,8,32]{2,1,0:T(8,128)}', space=vmem, size = 0x1000, scoped, tag = 'scratch operand']
  %s0 = inlined_call_operand.hbm [shape: f32[2,8,32], index: 0, kind: input, shape index: {}]
  %s1 = inlined_call_operand.vmem [shape: bf16[2,32,96], index: 1, kind: input, shape index: {}]
  %s2 = inlined_call_operand.hbm [shape: f32[2,1,96], index: 2, kind: input, shape index: {}]
  %s3 = inlined_call_operand.vmem [shape: bf16[2,32,32], index: 3, kind: input, shape index: {}]
  %s4 = inlined_call_operand.hbm [shape: f32[2,1,32], index: 4, kind: input, shape index: {}]
  %s5 = inlined_call_operand.hbm [shape: f32[2,1,32], index: 5, kind: input, shape index: {}]
  %s6 = inlined_call_operand.hbm [shape: f32[2,1,32], index: 6, kind: input, shape index: {}]
  %s7 = inlined_call_operand.vmem [shape: bf16[2,32,64], index: 7, kind: input, shape index: {}]
  %s8 = inlined_call_operand.hbm [shape: f32[2,1,64], index: 8, kind: input, shape index: {}]
  %s9 = inlined_call_operand.vmem [shape: bf16[2,64,32], index: 9, kind: input, shape index: {}]
  %s10 = inlined_call_operand.hbm [shape: f32[2,1,32], index: 10, kind: input, shape index: {}]
  %s11 = inlined_call_operand.hbm [shape: f32[2,1,32], index: 11, kind: input, shape index: {}]
  %s12 = inlined_call_operand.hbm [shape: f32[2,1,32], index: 12, kind: input, shape index: {}]
  %s13 = inlined_call_operand.vmem [shape: bf16[32,128], index: 13, kind: input, shape index: {}]
  %s14 = inlined_call_operand.vmem [shape: f32[1,128], index: 14, kind: input, shape index: {}]
  %s15 = inlined_call_operand.hbm [shape: f32[2,1,128], index: 15, kind: output, shape index: {}]
  %s16 = sld [smem:[#allocation0]]
  $region137: #{tpu_custom_call.1} parent=0
    _
  %s18 = ssub.s32 1, %s16
  %s19 = scalar_select 0, %s18, %s16
  $region1: #{tpu_custom_call.1} parent=0
    #allocation3 [shape = 'u8[8192]{0}', space=vmem, size = 0x2000, scoped, tag = 'input window, operand 0']
    #allocation4 [shape = 's32[2]{0}', space=sflag, size = 0x8, scoped, tag = 'scoped memory for tpu_custom_call.1']
    #allocation5 [shape = 's32[2]{0}', space=sflag, size = 0x8, scoped, tag = 'scoped memory for tpu_custom_call.1']
    #allocation6 [shape = 'u8[1024]{0}', space=vmem, size = 0x400, scoped, tag = 'input window, operand 2']
    #allocation7 [shape = 's32[2]{0}', space=sflag, size = 0x8, scoped, tag = 'scoped memory for tpu_custom_call.1']
    #allocation8 [shape = 'u8[1024]{0}', space=vmem, size = 0x400, scoped, tag = 'input window, operand 4']
    #allocation9 [shape = 'u8[1024]{0}', space=vmem, size = 0x400, scoped, tag = 'input window, operand 5']
    #allocation10 [shape = 's32[2]{0}', space=sflag, size = 0x8, scoped, tag = 'scoped memory for tpu_custom_call.1']
    #allocation11 [shape = 'u8[1024]{0}', space=vmem, size = 0x400, scoped, tag = 'input window, operand 6']
    #allocation12 [shape = 'u8[1024]{0}', space=vmem, size = 0x400, scoped, tag = 'input window, operand 8']
    #allocation13 [shape = 's32[2]{0}', space=sflag, size = 0x8, scoped, tag = 'scoped memory for tpu_custom_call.1']
    #allocation14 [shape = 'u8[1024]{0}', space=vmem, size = 0x400, scoped, tag = 'input window, operand 10']
    #allocation15 [shape = 'u8[1024]{0}', space=vmem, size = 0x400, scoped, tag = 'input window, operand 11']
    #allocation16 [shape = 's32[2]{0}', space=sflag, size = 0x8, scoped, tag = 'scoped memory for tpu_custom_call.1']
    #allocation17 [shape = 'u8[1024]{0}', space=vmem, size = 0x400, scoped, tag = 'input window, operand 12']
    #allocation18 [shape = 'u8[1024]{0}', space=vmem, size = 0x400, scoped, tag = 'output window, operand 0']
    %20 = vsyncpa [#allocation4], 0
    %s21 = scalar_lea.sflag [#allocation4], 1
    %22 = vsyncpa %s21, 0
    %23 = vsyncpa [#allocation7], 0
    %s24 = scalar_lea.sflag [#allocation7], 1
    %25 = vsyncpa %s24, 0
    %26 = vsyncpa [#allocation10], 0
    %s27 = scalar_lea.sflag [#allocation10], 1
    %28 = vsyncpa %s27, 0
    %29 = vsyncpa [#allocation13], 0
    %s30 = scalar_lea.sflag [#allocation13], 1
    %31 = vsyncpa %s30, 0
    %32 = vsyncpa [#allocation16], 0
    %s33 = scalar_lea.sflag [#allocation16], 1
    %34 = vsyncpa %s33, 0
    %35 = vsyncpa [#allocation5], 0
    %s36 = scalar_lea.sflag [#allocation5], 1
    %37 = vsyncpa %s36, 0
    loop: start=0, step=1, limit=6
    $region2: #{tpu_custom_call.1} parent=1 // loop_pre_header
      _
    $region3: #{tpu_custom_call.1} parent=1 // loop_header
      %s39 = sphi 0, %s43
      %p40 = scmp.ge.s32.totalorder %s39, 6
      %s46 = sphi 0, %s58
      %s47 = sphi 0, %s54
      %s48 = sphi 0, %s46
      %s49 = sphi 0, %s47
      %s50 = sphi 0, %s48
      %s51 = sphi 0, %s49
      %s61 = sphi 0, %s63
      %s64 = sphi 0, %s61
      %s65 = sphi 0, %s64
      %s81 = sphi 0, %s65
      %s87 = sphi 0, %s89
      %s90 = sphi 0, %s87
      %s91 = sphi 0, %s90
      %s107 = sphi 0, %s91
      %s113 = sphi 0, %s115
      %s116 = sphi 0, %s113
      %s117 = sphi 0, %s116
      %s133 = sphi 0, %s117
      %s139 = sphi 0, %s141
      %s142 = sphi 0, %s139
      %s143 = sphi 0, %s142
      %s159 = sphi 0, %s143
      %s165 = sphi 0, %s167
      %s168 = sphi 0, %s165
      %s169 = sphi 0, %s168
      %s185 = sphi 0, %s169
      %s191 = sphi 0, %s193
      %s194 = sphi 0, %s191
      %s195 = sphi 0, %s194
      %s211 = sphi 0, %s195
      %s217 = sphi 0, %s219
      %s220 = sphi 0, %s217
      %s221 = sphi 0, %s220
      %s237 = sphi 0, %s221
      %s243 = sphi 0, %s245
      %s246 = sphi 0, %s243
      %s247 = sphi 0, %s246
      %s263 = sphi 0, %s247
      %s269 = sphi 0, %s271
      %s272 = sphi 0, %s269
      %s273 = sphi 0, %s272
      %s289 = sphi 0, %s273
      %s295 = sphi 0, %s297
      %s298 = sphi 0, %s295
      %s299 = sphi 0, %s298
      %s315 = sphi 0, %s299
      %s321 = sphi 0, %s323
      %s324 = sphi 0, %s321
      %s325 = sphi 0, %s324
      %s341 = sphi 0, %s325
      %s347 = sphi 0, %s349
      %s350 = sphi 0, %s347
      %s351 = sphi 0, %s350
      %s367 = sphi 0, %s351
      %s373 = sphi 0, %s375
      %s376 = sphi 0, %s373
      %s377 = sphi 0, %s376
      %s393 = sphi 0, %s377
      %s397 = sphi 0, %s397
      %s399 = sphi 0, %s397
      %s400 = sphi 0, %s399
      %s414 = sphi 0, %s400
      %s418 = sphi 0, %s418
      %s420 = sphi 0, %s418
      %s421 = sphi 0, %s420
      %s435 = sphi 0, %s421
      %s441 = sphi 0, %s443
      %s444 = sphi 0, %s441
      %s445 = sphi 0, %s444
      %s461 = sphi 0, %s445
    $region4: #{tpu_custom_call.1} parent=1 // loop_header_branch
      %42 = sbr.rel (%p40) target = $region8
    $region5: #{tpu_custom_call.1} parent=1 // loop_body
      %s44 = ssub.s32 %s39, 1
      %s45 = ssub.s32 %s39, 2
      %s52 = sadd.s32 1, %s47
      %p53 = scmp.ge.s32.totalorder %s52, 2
      %s54 = scalar_select %p53, 0, %s52
      %s55 = sadd.s32 1, %s46
      %s56 = scalar_select %p53, %s55, %s46
      %p57 = scmp.ge.s32.totalorder %s56, 2
      %s58 = scalar_select %p57, 0, %s56
      %s59 = ssub.s32 %s46, %s58
      %p60 = scmp.eq.s32.totalorder %s59, 0
      %s62 = sadd.s32 %s61, 1
      %s63 = scalar_select %p60, %s61, %s62
      %p66 = pneg %p60
      %p67 = scmp.eq.s32.totalorder %s39, 3
      %p68 = por %p66, %p67
      %p69 = scmp.ne.s32.totalorder %s61, %s64
      %p70 = scmp.eq.s32.totalorder %s39, 0
      %p71 = por %p69, %p70
      %p72 = scmp.ne.s32.totalorder %s61, %s64
      %p73 = scmp.eq.s32.totalorder %s44, 3
      %p74 = por %p72, %p73
      %p75 = scmp.ne.s32.totalorder %s64, %s65
      %p76 = scmp.eq.s32.totalorder %s44, 0
      %p77 = por %p75, %p76
      %p78 = scmp.ne.s32.totalorder %s64, %s65
      %p79 = scmp.eq.s32.totalorder %s45, 3
      %p80 = por %p78, %p79
      %p82 = scmp.ne.s32.totalorder %s65, %s81
      %p83 = scmp.eq.s32.totalorder %s45, 0
      %p84 = por %p82, %p83
      %s85 = ssub.s32 %s47, %s54
      %p86 = scmp.eq.s32.totalorder %s85, 0
      %s88 = sadd.s32 %s87, 1
      %s89 = scalar_select %p86, %s87, %s88
      %p92 = pneg %p86
      %p93 = scmp.eq.s32.totalorder %s39, 3
      %p94 = por %p92, %p93
      %p95 = scmp.ne.s32.totalorder %s87, %s90
      %p96 = scmp.eq.s32.totalorder %s39, 0
      %p97 = por %p95, %p96
      %p98 = scmp.ne.s32.totalorder %s87, %s90
      %p99 = scmp.eq.s32.totalorder %s44, 3
      %p100 = por %p98, %p99
      %p101 = scmp.ne.s32.totalorder %s90, %s91
      %p102 = scmp.eq.s32.totalorder %s44, 0
      %p103 = por %p101, %p102
      %p104 = scmp.ne.s32.totalorder %s90, %s91
      %p105 = scmp.eq.s32.totalorder %s45, 3
      %p106 = por %p104, %p105
      %p108 = scmp.ne.s32.totalorder %s91, %s107
      %p109 = scmp.eq.s32.totalorder %s45, 0
      %p110 = por %p108, %p109
      %s111 = ssub.s32 %s47, %s54
      %p112 = scmp.eq.s32.totalorder %s111, 0
      %s114 = sadd.s32 %s113, 1
      %s115 = scalar_select %p112, %s113, %s114
      %p118 = pneg %p112
      %p119 = scmp.eq.s32.totalorder %s39, 3
      %p120 = por %p118, %p119
      %p121 = scmp.ne.s32.totalorder %s113, %s116
      %p122 = scmp.eq.s32.totalorder %s39, 0
      %p123 = por %p121, %p122
      %p124 = scmp.ne.s32.totalorder %s113, %s116
      %p125 = scmp.eq.s32.totalorder %s44, 3
      %p126 = por %p124, %p125
      %p127 = scmp.ne.s32.totalorder %s116, %s117
      %p128 = scmp.eq.s32.totalorder %s44, 0
      %p129 = por %p127, %p128
      %p130 = scmp.ne.s32.totalorder %s116, %s117
      %p131 = scmp.eq.s32.totalorder %s45, 3
      %p132 = por %p130, %p131
      %p134 = scmp.ne.s32.totalorder %s117, %s133
      %p135 = scmp.eq.s32.totalorder %s45, 0
      %p136 = por %p134, %p135
      %s137 = ssub.s32 %s47, %s54
      %p138 = scmp.eq.s32.totalorder %s137, 0
      %s140 = sadd.s32 %s139, 1
      %s141 = scalar_select %p138, %s139, %s140
      %p144 = pneg %p138
      %p145 = scmp.eq.s32.totalorder %s39, 3
      %p146 = por %p144, %p145
      %p147 = scmp.ne.s32.totalorder %s139, %s142
      %p148 = scmp.eq.s32.totalorder %s39, 0
      %p149 = por %p147, %p148
      %p150 = scmp.ne.s32.totalorder %s139, %s142
      %p151 = scmp.eq.s32.totalorder %s44, 3
      %p152 = por %p150, %p151
      %p153 = scmp.ne.s32.totalorder %s142, %s143
      %p154 = scmp.eq.s32.totalorder %s44, 0
      %p155 = por %p153, %p154
      %p156 = scmp.ne.s32.totalorder %s142, %s143
      %p157 = scmp.eq.s32.totalorder %s45, 3
      %p158 = por %p156, %p157
      %p160 = scmp.ne.s32.totalorder %s143, %s159
      %p161 = scmp.eq.s32.totalorder %s45, 0
      %p162 = por %p160, %p161
      %s163 = ssub.s32 %s47, %s54
      %p164 = scmp.eq.s32.totalorder %s163, 0
      %s166 = sadd.s32 %s165, 1
      %s167 = scalar_select %p164, %s165, %s166
      %p170 = pneg %p164
      %p171 = scmp.eq.s32.totalorder %s39, 3
      %p172 = por %p170, %p171
      %p173 = scmp.ne.s32.totalorder %s165, %s168
      %p174 = scmp.eq.s32.totalorder %s39, 0
      %p175 = por %p173, %p174
      %p176 = scmp.ne.s32.totalorder %s165, %s168
      %p177 = scmp.eq.s32.totalorder %s44, 3
      %p178 = por %p176, %p177
      %p179 = scmp.ne.s32.totalorder %s168, %s169
      %p180 = scmp.eq.s32.totalorder %s44, 0
      %p181 = por %p179, %p180
      %p182 = scmp.ne.s32.totalorder %s168, %s169
      %p183 = scmp.eq.s32.totalorder %s45, 3
      %p184 = por %p182, %p183
      %p186 = scmp.ne.s32.totalorder %s169, %s185
      %p187 = scmp.eq.s32.totalorder %s45, 0
      %p188 = por %p186, %p187
      %s189 = ssub.s32 %s47, %s54
      %p190 = scmp.eq.s32.totalorder %s189, 0
      %s192 = sadd.s32 %s191, 1
      %s193 = scalar_select %p190, %s191, %s192
      %p196 = pneg %p190
      %p197 = scmp.eq.s32.totalorder %s39, 3
      %p198 = por %p196, %p197
      %p199 = scmp.ne.s32.totalorder %s191, %s194
      %p200 = scmp.eq.s32.totalorder %s39, 0
      %p201 = por %p199, %p200
      %p202 = scmp.ne.s32.totalorder %s191, %s194
      %p203 = scmp.eq.s32.totalorder %s44, 3
      %p204 = por %p202, %p203
      %p205 = scmp.ne.s32.totalorder %s194, %s195
      %p206 = scmp.eq.s32.totalorder %s44, 0
      %p207 = por %p205, %p206
      %p208 = scmp.ne.s32.totalorder %s194, %s195
      %p209 = scmp.eq.s32.totalorder %s45, 3
      %p210 = por %p208, %p209
      %p212 = scmp.ne.s32.totalorder %s195, %s211
      %p213 = scmp.eq.s32.totalorder %s45, 0
      %p214 = por %p212, %p213
      %s215 = ssub.s32 %s47, %s54
      %p216 = scmp.eq.s32.totalorder %s215, 0
      %s218 = sadd.s32 %s217, 1
      %s219 = scalar_select %p216, %s217, %s218
      %p222 = pneg %p216
      %p223 = scmp.eq.s32.totalorder %s39, 3
      %p224 = por %p222, %p223
      %p225 = scmp.ne.s32.totalorder %s217, %s220
      %p226 = scmp.eq.s32.totalorder %s39, 0
      %p227 = por %p225, %p226
      %p228 = scmp.ne.s32.totalorder %s217, %s220
      %p229 = scmp.eq.s32.totalorder %s44, 3
      %p230 = por %p228, %p229
      %p231 = scmp.ne.s32.totalorder %s220, %s221
      %p232 = scmp.eq.s32.totalorder %s44, 0
      %p233 = por %p231, %p232
      %p234 = scmp.ne.s32.totalorder %s220, %s221
      %p235 = scmp.eq.s32.totalorder %s45, 3
      %p236 = por %p234, %p235
      %p238 = scmp.ne.s32.totalorder %s221, %s237
      %p239 = scmp.eq.s32.totalorder %s45, 0
      %p240 = por %p238, %p239
      %s241 = ssub.s32 %s47, %s54
      %p242 = scmp.eq.s32.totalorder %s241, 0
      %s244 = sadd.s32 %s243, 1
      %s245 = scalar_select %p242, %s243, %s244
      %p248 = pneg %p242
      %p249 = scmp.eq.s32.totalorder %s39, 3
      %p250 = por %p248, %p249
      %p251 = scmp.ne.s32.totalorder %s243, %s246
      %p252 = scmp.eq.s32.totalorder %s39, 0
      %p253 = por %p251, %p252
      %p254 = scmp.ne.s32.totalorder %s243, %s246
      %p255 = scmp.eq.s32.totalorder %s44, 3
      %p256 = por %p254, %p255
      %p257 = scmp.ne.s32.totalorder %s246, %s247
      %p258 = scmp.eq.s32.totalorder %s44, 0
      %p259 = por %p257, %p258
      %p260 = scmp.ne.s32.totalorder %s246, %s247
      %p261 = scmp.eq.s32.totalorder %s45, 3
      %p262 = por %p260, %p261
      %p264 = scmp.ne.s32.totalorder %s247, %s263
      %p265 = scmp.eq.s32.totalorder %s45, 0
      %p266 = por %p264, %p265
      %s267 = ssub.s32 %s47, %s54
      %p268 = scmp.eq.s32.totalorder %s267, 0
      %s270 = sadd.s32 %s269, 1
      %s271 = scalar_select %p268, %s269, %s270
      %p274 = pneg %p268
      %p275 = scmp.eq.s32.totalorder %s39, 3
      %p276 = por %p274, %p275
      %p277 = scmp.ne.s32.totalorder %s269, %s272
      %p278 = scmp.eq.s32.totalorder %s39, 0
      %p279 = por %p277, %p278
      %p280 = scmp.ne.s32.totalorder %s269, %s272
      %p281 = scmp.eq.s32.totalorder %s44, 3
      %p282 = por %p280, %p281
      %p283 = scmp.ne.s32.totalorder %s272, %s273
      %p284 = scmp.eq.s32.totalorder %s44, 0
      %p285 = por %p283, %p284
      %p286 = scmp.ne.s32.totalorder %s272, %s273
      %p287 = scmp.eq.s32.totalorder %s45, 3
      %p288 = por %p286, %p287
      %p290 = scmp.ne.s32.totalorder %s273, %s289
      %p291 = scmp.eq.s32.totalorder %s45, 0
      %p292 = por %p290, %p291
      %s293 = ssub.s32 %s47, %s54
      %p294 = scmp.eq.s32.totalorder %s293, 0
      %s296 = sadd.s32 %s295, 1
      %s297 = scalar_select %p294, %s295, %s296
      %p300 = pneg %p294
      %p301 = scmp.eq.s32.totalorder %s39, 3
      %p302 = por %p300, %p301
      %p303 = scmp.ne.s32.totalorder %s295, %s298
      %p304 = scmp.eq.s32.totalorder %s39, 0
      %p305 = por %p303, %p304
      %p306 = scmp.ne.s32.totalorder %s295, %s298
      %p307 = scmp.eq.s32.totalorder %s44, 3
      %p308 = por %p306, %p307
      %p309 = scmp.ne.s32.totalorder %s298, %s299
      %p310 = scmp.eq.s32.totalorder %s44, 0
      %p311 = por %p309, %p310
      %p312 = scmp.ne.s32.totalorder %s298, %s299
      %p313 = scmp.eq.s32.totalorder %s45, 3
      %p314 = por %p312, %p313
      %p316 = scmp.ne.s32.totalorder %s299, %s315
      %p317 = scmp.eq.s32.totalorder %s45, 0
      %p318 = por %p316, %p317
      %s319 = ssub.s32 %s47, %s54
      %p320 = scmp.eq.s32.totalorder %s319, 0
      %s322 = sadd.s32 %s321, 1
      %s323 = scalar_select %p320, %s321, %s322
      %p326 = pneg %p320
      %p327 = scmp.eq.s32.totalorder %s39, 3
      %p328 = por %p326, %p327
      %p329 = scmp.ne.s32.totalorder %s321, %s324
      %p330 = scmp.eq.s32.totalorder %s39, 0
      %p331 = por %p329, %p330
      %p332 = scmp.ne.s32.totalorder %s321, %s324
      %p333 = scmp.eq.s32.totalorder %s44, 3
      %p334 = por %p332, %p333
      %p335 = scmp.ne.s32.totalorder %s324, %s325
      %p336 = scmp.eq.s32.totalorder %s44, 0
      %p337 = por %p335, %p336
      %p338 = scmp.ne.s32.totalorder %s324, %s325
      %p339 = scmp.eq.s32.totalorder %s45, 3
      %p340 = por %p338, %p339
      %p342 = scmp.ne.s32.totalorder %s325, %s341
      %p343 = scmp.eq.s32.totalorder %s45, 0
      %p344 = por %p342, %p343
      %s345 = ssub.s32 %s47, %s54
      %p346 = scmp.eq.s32.totalorder %s345, 0
      %s348 = sadd.s32 %s347, 1
      %s349 = scalar_select %p346, %s347, %s348
      %p352 = pneg %p346
      %p353 = scmp.eq.s32.totalorder %s39, 3
      %p354 = por %p352, %p353
      %p355 = scmp.ne.s32.totalorder %s347, %s350
      %p356 = scmp.eq.s32.totalorder %s39, 0
      %p357 = por %p355, %p356
      %p358 = scmp.ne.s32.totalorder %s347, %s350
      %p359 = scmp.eq.s32.totalorder %s44, 3
      %p360 = por %p358, %p359
      %p361 = scmp.ne.s32.totalorder %s350, %s351
      %p362 = scmp.eq.s32.totalorder %s44, 0
      %p363 = por %p361, %p362
      %p364 = scmp.ne.s32.totalorder %s350, %s351
      %p365 = scmp.eq.s32.totalorder %s45, 3
      %p366 = por %p364, %p365
      %p368 = scmp.ne.s32.totalorder %s351, %s367
      %p369 = scmp.eq.s32.totalorder %s45, 0
      %p370 = por %p368, %p369
      %s371 = ssub.s32 %s47, %s54
      %p372 = scmp.eq.s32.totalorder %s371, 0
      %s374 = sadd.s32 %s373, 1
      %s375 = scalar_select %p372, %s373, %s374
      %p378 = pneg %p372
      %p379 = scmp.eq.s32.totalorder %s39, 3
      %p380 = por %p378, %p379
      %p381 = scmp.ne.s32.totalorder %s373, %s376
      %p382 = scmp.eq.s32.totalorder %s39, 0
      %p383 = por %p381, %p382
      %p384 = scmp.ne.s32.totalorder %s373, %s376
      %p385 = scmp.eq.s32.totalorder %s44, 3
      %p386 = por %p384, %p385
      %p387 = scmp.ne.s32.totalorder %s376, %s377
      %p388 = scmp.eq.s32.totalorder %s44, 0
      %p389 = por %p387, %p388
      %p390 = scmp.ne.s32.totalorder %s376, %s377
      %p391 = scmp.eq.s32.totalorder %s45, 3
      %p392 = por %p390, %p391
      %p394 = scmp.ne.s32.totalorder %s377, %s393
      %p395 = scmp.eq.s32.totalorder %s45, 0
      %p396 = por %p394, %p395
      %s398 = sadd.s32 %s397, 1
      %p401 = scmp.eq.s32.totalorder %s39, 3
      %p402 = scmp.ne.s32.totalorder %s397, %s399
      %p403 = scmp.eq.s32.totalorder %s39, 0
      %p404 = por %p402, %p403
      %p405 = scmp.ne.s32.totalorder %s397, %s399
      %p406 = scmp.eq.s32.totalorder %s44, 3
      %p407 = por %p405, %p406
      %p408 = scmp.ne.s32.totalorder %s399, %s400
      %p409 = scmp.eq.s32.totalorder %s44, 0
      %p410 = por %p408, %p409
      %p411 = scmp.ne.s32.totalorder %s399, %s400
      %p412 = scmp.eq.s32.totalorder %s45, 3
      %p413 = por %p411, %p412
      %p415 = scmp.ne.s32.totalorder %s400, %s414
      %p416 = scmp.eq.s32.totalorder %s45, 0
      %p417 = por %p415, %p416
      %s419 = sadd.s32 %s418, 1
      %p422 = scmp.eq.s32.totalorder %s39, 3
      %p423 = scmp.ne.s32.totalorder %s418, %s420
      %p424 = scmp.eq.s32.totalorder %s39, 0
      %p425 = por %p423, %p424
      %p426 = scmp.ne.s32.totalorder %s418, %s420
      %p427 = scmp.eq.s32.totalorder %s44, 3
      %p428 = por %p426, %p427
      %p429 = scmp.ne.s32.totalorder %s420, %s421
      %p430 = scmp.eq.s32.totalorder %s44, 0
      %p431 = por %p429, %p430
      %p432 = scmp.ne.s32.totalorder %s420, %s421
      %p433 = scmp.eq.s32.totalorder %s45, 3
      %p434 = por %p432, %p433
      %p436 = scmp.ne.s32.totalorder %s421, %s435
      %p437 = scmp.eq.s32.totalorder %s45, 0
      %p438 = por %p436, %p437
      %s439 = ssub.s32 %s46, %s58
      %p440 = scmp.eq.s32.totalorder %s439, 0
      %s442 = sadd.s32 %s441, 1
      %s443 = scalar_select %p440, %s441, %s442
      %p446 = pneg %p440
      %p447 = scmp.eq.s32.totalorder %s39, 3
      %p448 = por %p446, %p447
      %p449 = scmp.ne.s32.totalorder %s441, %s444
      %p450 = scmp.eq.s32.totalorder %s39, 0
      %p451 = por %p449, %p450
      %p452 = scmp.ne.s32.totalorder %s441, %s444
      %p453 = scmp.eq.s32.totalorder %s44, 3
      %p454 = por %p452, %p453
      %p455 = scmp.ne.s32.totalorder %s444, %s445
      %p456 = scmp.eq.s32.totalorder %s44, 0
      %p457 = por %p455, %p456
      %p458 = scmp.ne.s32.totalorder %s444, %s445
      %p459 = scmp.eq.s32.totalorder %s45, 3
      %p460 = por %p458, %p459
      %p462 = scmp.ne.s32.totalorder %s445, %s461
      %p463 = scmp.eq.s32.totalorder %s45, 0
      %p464 = por %p462, %p463
      %p465 = scmp.le.s32.totalorder 1, %s39
      %p466 = scmp.lt.s32.totalorder %s39, 5
      %p467 = pnand %p465, %p466
      %p468 = pneg %p467
      // Predicated region
      $region9: #{tpu_custom_call.1} parent=5 // pred_check
        _
      $region10: #{tpu_custom_call.1} parent=5 // pred_check_branch
        %470 = sbr.rel (%p467) target = $region12
      $region11: #{tpu_custom_call.1} parent=5 // pred_region
        %s471 = ssub.s32 %s39, 1
        // Predicated region
        $region13: #{tpu_custom_call.1} parent=11 // pred_check
          %p472 = pneg %p410
        $region14: #{tpu_custom_call.1} parent=11 // pred_check_branch
          %474 = sbr.rel (%p472) target = $region16
        $region15: #{tpu_custom_call.1} parent=11 // pred_region
          _
        $region16: #{tpu_custom_call.1} parent=11 // pred_fallthru
          _
        // Predicated region
        $region17: #{tpu_custom_call.1} parent=11 // pred_check
          %p475 = pneg %p431
        $region18: #{tpu_custom_call.1} parent=11 // pred_check_branch
          %477 = sbr.rel (%p475) target = $region20
        $region19: #{tpu_custom_call.1} parent=11 // pred_region
          _
        $region20: #{tpu_custom_call.1} parent=11 // pred_fallthru
          _
      $region12: #{tpu_custom_call.1} parent=5 // pred_fallthru
        _
      %p478 = scmp.lt.s32.totalorder %s39, 4
      // Predicated region
      $region21: #{tpu_custom_call.1} parent=5 // pred_check
        %p479 = pneg %p478
      $region22: #{tpu_custom_call.1} parent=5 // pred_check_branch
        %481 = sbr.rel (%p479) target = $region24
      $region23: #{tpu_custom_call.1} parent=5 // pred_region
        // Predicated region
        $region25: #{tpu_custom_call.1} parent=23 // pred_check
          %p482 = pneg %p71
        $region26: #{tpu_custom_call.1} parent=23 // pred_check_branch
          %484 = sbr.rel (%p482) target = $region28
        $region27: #{tpu_custom_call.1} parent=23 // pred_region
          %s485 = sand.u32 %s61, 1
          %s486 = scalar_lea.sflag [#allocation4], %s485
          %s487 = sand.u32 %s61, 1
          %s488 = smul.addr %s487, 8
          %s489 = scalar_lea.vmem [#allocation3], %s488
          %s491 = ssub.s32 128, 128
          %492 = vsyncadd %s486, %s491
          %s493 = smul.addr %s46, 128
          %s494 = scalar_lea.hbm %s0, %s493
          %s496 = sshll.u32 %s489, 4
          %s497 = int_to_ptr.vmem [resolvable:$true] %s496
          %499 = dma.hbm_to_vmem [thread:$0]  %s494, 128, %s497, %s486
        $region28: #{tpu_custom_call.1} parent=23 // pred_fallthru
          _
        // Predicated region
        $region29: #{tpu_custom_call.1} parent=23 // pred_check
          %p500 = pneg %p97
        $region30: #{tpu_custom_call.1} parent=23 // pred_check_branch
          %502 = sbr.rel (%p500) target = $region32
        $region31: #{tpu_custom_call.1} parent=23 // pred_region
          %p503 = scmp.lt.s32.totalorder %s47, 1
          %s504 = scalar_select %p503, %s47, 1
          %s505 = smul.addr %s504, 4
          %s506 = smul.addr %s505, 4
          %s507 = scalar_lea.vmem %s1, %s506
        $region32: #{tpu_custom_call.1} parent=23 // pred_fallthru
          _
        // Predicated region
        $region33: #{tpu_custom_call.1} parent=23 // pred_check
          %p508 = pneg %p123
        $region34: #{tpu_custom_call.1} parent=23 // pred_check_branch
          %510 = sbr.rel (%p508) target = $region36
        $region35: #{tpu_custom_call.1} parent=23 // pred_region
          %s511 = sand.u32 %s39, 1
          %s512 = scalar_lea.sflag [#allocation7], %s511
          %s513 = sand.u32 %s113, 1
          %s514 = scalar_lea.vmem [#allocation6], %s513
          %s516 = ssub.s32 16, 16
          %517 = vsyncadd %s512, %s516
          %s518 = smul.addr %s47, 16
          %s519 = scalar_lea.hbm %s2, %s518
          %s521 = sshll.u32 %s514, 4
          %s522 = int_to_ptr.vmem [resolvable:$true] %s521
          %524 = dma.hbm_to_vmem [thread:$0]  %s519, 16, %s522, %s512
        $region36: #{tpu_custom_call.1} parent=23 // pred_fallthru
          _
        // Predicated region
        $region37: #{tpu_custom_call.1} parent=23 // pred_check
          %p525 = pneg %p149
        $region38: #{tpu_custom_call.1} parent=23 // pred_check_branch
          %527 = sbr.rel (%p525) target = $region40
        $region39: #{tpu_custom_call.1} parent=23 // pred_region
          %p528 = scmp.lt.s32.totalorder %s47, 1
          %s529 = scalar_select %p528, %s47, 1
          %s530 = smul.addr %s529, 4
          %s531 = smul.addr %s530, 4
          %s532 = scalar_lea.vmem %s3, %s531
        $region40: #{tpu_custom_call.1} parent=23 // pred_fallthru
          _
        // Predicated region
        $region41: #{tpu_custom_call.1} parent=23 // pred_check
          %p533 = pneg %p175
        $region42: #{tpu_custom_call.1} parent=23 // pred_check_branch
          %535 = sbr.rel (%p533) target = $region44
        $region43: #{tpu_custom_call.1} parent=23 // pred_region
          %s536 = sand.u32 %s39, 1
          %s537 = scalar_lea.sflag [#allocation7], %s536
          %s538 = sand.u32 %s165, 1
          %s539 = scalar_lea.vmem [#allocation8], %s538
          %s541 = ssub.s32 16, 16
          %542 = vsyncadd %s537, %s541
          %s543 = smul.addr %s47, 16
          %s544 = scalar_lea.hbm %s4, %s543
          %s546 = sshll.u32 %s539, 4
          %s547 = int_to_ptr.vmem [resolvable:$true] %s546
          %549 = dma.hbm_to_vmem [thread:$0]  %s544, 16, %s547, %s537
        $region44: #{tpu_custom_call.1} parent=23 // pred_fallthru
          _
        // Predicated region
        $region45: #{tpu_custom_call.1} parent=23 // pred_check
          %p550 = pneg %p201
        $region46: #{tpu_custom_call.1} parent=23 // pred_check_branch
          %552 = sbr.rel (%p550) target = $region48
        $region47: #{tpu_custom_call.1} parent=23 // pred_region
          %s553 = sand.u32 %s39, 1
          %s554 = scalar_lea.sflag [#allocation10], %s553
          %s555 = sand.u32 %s191, 1
          %s556 = scalar_lea.vmem [#allocation9], %s555
          %s558 = ssub.s32 16, 16
          %559 = vsyncadd %s554, %s558
          %s560 = smul.addr %s47, 16
          %s561 = scalar_lea.hbm %s5, %s560
          %s563 = sshll.u32 %s556, 4
          %s564 = int_to_ptr.vmem [resolvable:$true] %s563
          %566 = dma.hbm_to_vmem [thread:$0]  %s561, 16, %s564, %s554
        $region48: #{tpu_custom_call.1} parent=23 // pred_fallthru
          _
        // Predicated region
        $region49: #{tpu_custom_call.1} parent=23 // pred_check
          %p567 = pneg %p227
        $region50: #{tpu_custom_call.1} parent=23 // pred_check_branch
          %569 = sbr.rel (%p567) target = $region52
        $region51: #{tpu_custom_call.1} parent=23 // pred_region
          %s570 = sand.u32 %s39, 1
          %s571 = scalar_lea.sflag [#allocation10], %s570
          %s572 = sand.u32 %s217, 1
          %s573 = scalar_lea.vmem [#allocation11], %s572
          %s575 = ssub.s32 16, 16
          %576 = vsyncadd %s571, %s575
          %s577 = smul.addr %s47, 16
          %s578 = scalar_lea.hbm %s6, %s577
          %s580 = sshll.u32 %s573, 4
          %s581 = int_to_ptr.vmem [resolvable:$true] %s580
          %583 = dma.hbm_to_vmem [thread:$0]  %s578, 16, %s581, %s571
        $region52: #{tpu_custom_call.1} parent=23 // pred_fallthru
          _
        // Predicated region
        $region53: #{tpu_custom_call.1} parent=23 // pred_check
          %p584 = pneg %p253
        $region54: #{tpu_custom_call.1} parent=23 // pred_check_branch
          %586 = sbr.rel (%p584) target = $region56
        $region55: #{tpu_custom_call.1} parent=23 // pred_region
          %p587 = scmp.lt.s32.totalorder %s47, 1
          %s588 = scalar_select %p587, %s47, 1
          %s589 = smul.addr %s588, 4
          %s590 = smul.addr %s589, 4
          %s591 = scalar_lea.vmem %s7, %s590
        $region56: #{tpu_custom_call.1} parent=23 // pred_fallthru
          _
        // Predicated region
        $region57: #{tpu_custom_call.1} parent=23 // pred_check
          %p592 = pneg %p279
        $region58: #{tpu_custom_call.1} parent=23 // pred_check_branch
          %594 = sbr.rel (%p592) target = $region60
        $region59: #{tpu_custom_call.1} parent=23 // pred_region
          %s595 = sand.u32 %s39, 1
          %s596 = scalar_lea.sflag [#allocation13], %s595
          %s597 = sand.u32 %s269, 1
          %s598 = scalar_lea.vmem [#allocation12], %s597
          %s600 = ssub.s32 16, 16
          %601 = vsyncadd %s596, %s600
          %s602 = smul.addr %s47, 16
          %s603 = scalar_lea.hbm %s8, %s602
          %s605 = sshll.u32 %s598, 4
          %s606 = int_to_ptr.vmem [resolvable:$true] %s605
          %608 = dma.hbm_to_vmem [thread:$0]  %s603, 16, %s606, %s596
        $region60: #{tpu_custom_call.1} parent=23 // pred_fallthru
          _
        // Predicated region
        $region61: #{tpu_custom_call.1} parent=23 // pred_check
          %p609 = pneg %p305
        $region62: #{tpu_custom_call.1} parent=23 // pred_check_branch
          %611 = sbr.rel (%p609) target = $region64
        $region63: #{tpu_custom_call.1} parent=23 // pred_region
          %p612 = scmp.lt.s32.totalorder %s47, 1
          %s613 = scalar_select %p612, %s47, 1
          %s614 = smul.addr %s613, 8
          %s615 = smul.addr %s614, 4
          %s616 = scalar_lea.vmem %s9, %s615
        $region64: #{tpu_custom_call.1} parent=23 // pred_fallthru
          _
        // Predicated region
        $region65: #{tpu_custom_call.1} parent=23 // pred_check
          %p617 = pneg %p331
        $region66: #{tpu_custom_call.1} parent=23 // pred_check_branch
          %619 = sbr.rel (%p617) target = $region68
        $region67: #{tpu_custom_call.1} parent=23 // pred_region
          %s620 = sand.u32 %s39, 1
          %s621 = scalar_lea.sflag [#allocation13], %s620
          %s622 = sand.u32 %s321, 1
          %s623 = scalar_lea.vmem [#allocation14], %s622
          %s625 = ssub.s32 16, 16
          %626 = vsyncadd %s621, %s625
          %s627 = smul.addr %s47, 16
          %s628 = scalar_lea.hbm %s10, %s627
          %s630 = sshll.u32 %s623, 4
          %s631 = int_to_ptr.vmem [resolvable:$true] %s630
          %633 = dma.hbm_to_vmem [thread:$0]  %s628, 16, %s631, %s621
        $region68: #{tpu_custom_call.1} parent=23 // pred_fallthru
          _
        // Predicated region
        $region69: #{tpu_custom_call.1} parent=23 // pred_check
          %p634 = pneg %p357
        $region70: #{tpu_custom_call.1} parent=23 // pred_check_branch
          %636 = sbr.rel (%p634) target = $region72
        $region71: #{tpu_custom_call.1} parent=23 // pred_region
          %s637 = sand.u32 %s39, 1
          %s638 = scalar_lea.sflag [#allocation16], %s637
          %s639 = sand.u32 %s347, 1
          %s640 = scalar_lea.vmem [#allocation15], %s639
          %s642 = ssub.s32 16, 16
          %643 = vsyncadd %s638, %s642
          %s644 = smul.addr %s47, 16
          %s645 = scalar_lea.hbm %s11, %s644
          %s647 = sshll.u32 %s640, 4
          %s648 = int_to_ptr.vmem [resolvable:$true] %s647
          %650 = dma.hbm_to_vmem [thread:$0]  %s645, 16, %s648, %s638
        $region72: #{tpu_custom_call.1} parent=23 // pred_fallthru
          _
        // Predicated region
        $region73: #{tpu_custom_call.1} parent=23 // pred_check
          %p651 = pneg %p383
        $region74: #{tpu_custom_call.1} parent=23 // pred_check_branch
          %653 = sbr.rel (%p651) target = $region76
        $region75: #{tpu_custom_call.1} parent=23 // pred_region
          %s654 = sand.u32 %s39, 1
          %s655 = scalar_lea.sflag [#allocation16], %s654
          %s656 = sand.u32 %s373, 1
          %s657 = scalar_lea.vmem [#allocation17], %s656
          %s659 = ssub.s32 16, 16
          %660 = vsyncadd %s655, %s659
          %s661 = smul.addr %s47, 16
          %s662 = scalar_lea.hbm %s12, %s661
          %s664 = sshll.u32 %s657, 4
          %s665 = int_to_ptr.vmem [resolvable:$true] %s664
          %667 = dma.hbm_to_vmem [thread:$0]  %s662, 16, %s665, %s655
        $region76: #{tpu_custom_call.1} parent=23 // pred_fallthru
          _
      $region24: #{tpu_custom_call.1} parent=5 // pred_fallthru
        _
      %p668 = scmp.le.s32.totalorder 1, %s39
      %p669 = scmp.lt.s32.totalorder %s39, 5
      %p670 = pnand %p668, %p669
      %p671 = pneg %p670
      // Predicated region
      $region77: #{tpu_custom_call.1} parent=5 // pred_check
        _
      $region78: #{tpu_custom_call.1} parent=5 // pred_check_branch
        %673 = sbr.rel (%p670) target = $region80
      $region79: #{tpu_custom_call.1} parent=5 // pred_region
        %s674 = ssub.s32 %s39, 1
        %s675 = sand.u32 %s64, 1
        %s676 = scalar_lea.sflag [#allocation4], %s675
        %s677 = sand.u32 %s64, 1
        %s678 = smul.addr %s677, 8
        %s679 = scalar_lea.vmem [#allocation3], %s678
        // Predicated region
        $region81: #{tpu_custom_call.1} parent=79 // pred_check
          %p680 = pneg %p77
        $region82: #{tpu_custom_call.1} parent=79 // pred_check_branch
          %682 = sbr.rel (%p680) target = $region84
        $region83: #{tpu_custom_call.1} parent=79 // pred_region
          %683 = dma.done %s676, 128
        $region84: #{tpu_custom_call.1} parent=79 // pred_fallthru
          _
        %s684 = sand.u32 %s44, 1
        %s685 = scalar_lea.sflag [#allocation7], %s684
        %s686 = sand.u32 %s116, 1
        %s687 = scalar_lea.vmem [#allocation6], %s686
        // Predicated region
        $region85: #{tpu_custom_call.1} parent=79 // pred_check
          %p688 = pneg %p129
        $region86: #{tpu_custom_call.1} parent=79 // pred_check_branch
          %690 = sbr.rel (%p688) target = $region88
        $region87: #{tpu_custom_call.1} parent=79 // pred_region
          %691 = dma.done %s685, 16
        $region88: #{tpu_custom_call.1} parent=79 // pred_fallthru
          _
        %s692 = sand.u32 %s44, 1
        %s693 = scalar_lea.sflag [#allocation7], %s692
        %s694 = sand.u32 %s168, 1
        %s695 = scalar_lea.vmem [#allocation8], %s694
        // Predicated region
        $region89: #{tpu_custom_call.1} parent=79 // pred_check
          %p696 = pneg %p181
        $region90: #{tpu_custom_call.1} parent=79 // pred_check_branch
          %698 = sbr.rel (%p696) target = $region92
        $region91: #{tpu_custom_call.1} parent=79 // pred_region
          %699 = dma.done %s693, 16
        $region92: #{tpu_custom_call.1} parent=79 // pred_fallthru
          _
        %s700 = sand.u32 %s44, 1
        %s701 = scalar_lea.sflag [#allocation10], %s700
        %s702 = sand.u32 %s194, 1
        %s703 = scalar_lea.vmem [#allocation9], %s702
        // Predicated region
        $region93: #{tpu_custom_call.1} parent=79 // pred_check
          %p704 = pneg %p207
        $region94: #{tpu_custom_call.1} parent=79 // pred_check_branch
          %706 = sbr.rel (%p704) target = $region96
        $region95: #{tpu_custom_call.1} parent=79 // pred_region
          %707 = dma.done %s701, 16
        $region96: #{tpu_custom_call.1} parent=79 // pred_fallthru
          _
        %s708 = sand.u32 %s44, 1
        %s709 = scalar_lea.sflag [#allocation10], %s708
        %s710 = sand.u32 %s220, 1
        %s711 = scalar_lea.vmem [#allocation11], %s710
        // Predicated region
        $region97: #{tpu_custom_call.1} parent=79 // pred_check
          %p712 = pneg %p233
        $region98: #{tpu_custom_call.1} parent=79 // pred_check_branch
          %714 = sbr.rel (%p712) target = $region100
        $region99: #{tpu_custom_call.1} parent=79 // pred_region
          %715 = dma.done %s709, 16
        $region100: #{tpu_custom_call.1} parent=79 // pred_fallthru
          _
        %s716 = sand.u32 %s44, 1
        %s717 = scalar_lea.sflag [#allocation13], %s716
        %s718 = sand.u32 %s272, 1
        %s719 = scalar_lea.vmem [#allocation12], %s718
        // Predicated region
        $region101: #{tpu_custom_call.1} parent=79 // pred_check
          %p720 = pneg %p285
        $region102: #{tpu_custom_call.1} parent=79 // pred_check_branch
          %722 = sbr.rel (%p720) target = $region104
        $region103: #{tpu_custom_call.1} parent=79 // pred_region
          %723 = dma.done %s717, 16
        $region104: #{tpu_custom_call.1} parent=79 // pred_fallthru
          _
        %s724 = sand.u32 %s44, 1
        %s725 = scalar_lea.sflag [#allocation13], %s724
        %s726 = sand.u32 %s324, 1
        %s727 = scalar_lea.vmem [#allocation14], %s726
        // Predicated region
        $region105: #{tpu_custom_call.1} parent=79 // pred_check
          %p728 = pneg %p337
        $region106: #{tpu_custom_call.1} parent=79 // pred_check_branch
          %730 = sbr.rel (%p728) target = $region108
        $region107: #{tpu_custom_call.1} parent=79 // pred_region
          %731 = dma.done %s725, 16
        $region108: #{tpu_custom_call.1} parent=79 // pred_fallthru
          _
        %s732 = sand.u32 %s44, 1
        %s733 = scalar_lea.sflag [#allocation16], %s732
        %s734 = sand.u32 %s350, 1
        %s735 = scalar_lea.vmem [#allocation15], %s734
        // Predicated region
        $region109: #{tpu_custom_call.1} parent=79 // pred_check
          %p736 = pneg %p363
        $region110: #{tpu_custom_call.1} parent=79 // pred_check_branch
          %738 = sbr.rel (%p736) target = $region112
        $region111: #{tpu_custom_call.1} parent=79 // pred_region
          %739 = dma.done %s733, 16
        $region112: #{tpu_custom_call.1} parent=79 // pred_fallthru
          _
        %s740 = sand.u32 %s44, 1
        %s741 = scalar_lea.sflag [#allocation16], %s740
        %s742 = sand.u32 %s376, 1
        %s743 = scalar_lea.vmem [#allocation17], %s742
        // Predicated region
        $region113: #{tpu_custom_call.1} parent=79 // pred_check
          %p744 = pneg %p389
        $region114: #{tpu_custom_call.1} parent=79 // pred_check_branch
          %746 = sbr.rel (%p744) target = $region116
        $region115: #{tpu_custom_call.1} parent=79 // pred_region
          %747 = dma.done %s741, 16
        $region116: #{tpu_custom_call.1} parent=79 // pred_fallthru
          _
        %s748 = sand.u32 %s64, 1
        %s749 = scalar_lea.sflag [#allocation4], %s748
        %s750 = sand.u32 %s64, 1
        %s751 = smul.addr %s750, 8
        %s752 = scalar_lea.vmem [#allocation3], %s751
        %p753 = pneg %p77
        %p754 = pneg %p74
        %p755 = scmp.lt.s32.totalorder %s49, 1
        %s756 = scalar_select %p755, %s49, 1
        %s757 = smul.addr %s756, 4
        %s758 = smul.addr %s757, 4
        %s759 = scalar_lea.vmem %s1, %s758
        %p760 = pneg %p103
        %p761 = pneg %p100
        %s762 = sand.u32 %s44, 1
        %s763 = scalar_lea.sflag [#allocation7], %s762
        %s764 = sand.u32 %s116, 1
        %s765 = scalar_lea.vmem [#allocation6], %s764
        %p766 = pneg %p129
        %p767 = pneg %p126
        %p768 = scmp.lt.s32.totalorder %s49, 1
        %s769 = scalar_select %p768, %s49, 1
        %s770 = smul.addr %s769, 4
        %s771 = smul.addr %s770, 4
        %s772 = scalar_lea.vmem %s3, %s771
        %p773 = pneg %p155
        %p774 = pneg %p152
        %s775 = sand.u32 %s44, 1
        %s776 = scalar_lea.sflag [#allocation7], %s775
        %s777 = sand.u32 %s168, 1
        %s778 = scalar_lea.vmem [#allocation8], %s777
        %p779 = pneg %p181
        %p780 = pneg %p178
        %s781 = sand.u32 %s44, 1
        %s782 = scalar_lea.sflag [#allocation10], %s781
        %s783 = sand.u32 %s194, 1
        %s784 = scalar_lea.vmem [#allocation9], %s783
        %p785 = pneg %p207
        %p786 = pneg %p204
        %s787 = sand.u32 %s44, 1
        %s788 = scalar_lea.sflag [#allocation10], %s787
        %s789 = sand.u32 %s220, 1
        %s790 = scalar_lea.vmem [#allocation11], %s789
        %p791 = pneg %p233
        %p792 = pneg %p230
        %p793 = scmp.lt.s32.totalorder %s49, 1
        %s794 = scalar_select %p793, %s49, 1
        %s795 = smul.addr %s794, 4
        %s796 = smul.addr %s795, 4
        %s797 = scalar_lea.vmem %s7, %s796
        %p798 = pneg %p259
        %p799 = pneg %p256
        %s800 = sand.u32 %s44, 1
        %s801 = scalar_lea.sflag [#allocation13], %s800
        %s802 = sand.u32 %s272, 1
        %s803 = scalar_lea.vmem [#allocation12], %s802
        %p804 = pneg %p285
        %p805 = pneg %p282
        %p806 = scmp.lt.s32.totalorder %s49, 1
        %s807 = scalar_select %p806, %s49, 1
        %s808 = smul.addr %s807, 8
        %s809 = smul.addr %s808, 4
        %s810 = scalar_lea.vmem %s9, %s809
        %p811 = pneg %p311
        %p812 = pneg %p308
        %s813 = sand.u32 %s44, 1
        %s814 = scalar_lea.sflag [#allocation13], %s813
        %s815 = sand.u32 %s324, 1
        %s816 = scalar_lea.vmem [#allocation14], %s815
        %p817 = pneg %p337
        %p818 = pneg %p334
        %s819 = sand.u32 %s44, 1
        %s820 = scalar_lea.sflag [#allocation16], %s819
        %s821 = sand.u32 %s350, 1
        %s822 = scalar_lea.vmem [#allocation15], %s821
        %p823 = pneg %p363
        %p824 = pneg %p360
        %s825 = sand.u32 %s44, 1
        %s826 = scalar_lea.sflag [#allocation16], %s825
        %s827 = sand.u32 %s376, 1
        %s828 = scalar_lea.vmem [#allocation17], %s827
        %p829 = pneg %p389
        %p830 = pneg %p386
        %p831 = pneg %p410
        %p832 = pneg %p407
        %p833 = pneg %p431
        %p834 = pneg %p428
        %p835 = pneg %p457
        %p836 = pneg %p454
        %s837 = sand.u32 %s444, 1
        %s838 = scalar_lea.sflag [#allocation5], %s837
        %s839 = sand.u32 %s444, 1
        %s840 = scalar_lea.vmem [#allocation18], %s839
        %p841 = scmp.lt.s32.totalorder %s49, 1
        %s842 = scalar_select %p841, %s49, 1
        %s843 = smul.addr %s842, 4
        %s844 = smul.addr %s843, 4
        %s845 = scalar_lea.vmem %s1, %s844
        %p846 = scmp.lt.s32.totalorder %s49, 1
        %s847 = scalar_select %p846, %s49, 1
        %s848 = smul.addr %s847, 4
        %s849 = smul.addr %s848, 4
        %s850 = scalar_lea.vmem %s3, %s849
        %p851 = scmp.lt.s32.totalorder %s49, 1
        %s852 = scalar_select %p851, %s49, 1
        %s853 = smul.addr %s852, 4
        %s854 = smul.addr %s853, 4
        %s855 = scalar_lea.vmem %s7, %s854
        %p856 = scmp.lt.s32.totalorder %s49, 1
        %s857 = scalar_select %p856, %s49, 1
        %s858 = smul.addr %s857, 8
        %s859 = smul.addr %s858, 4
        %s860 = scalar_lea.vmem %s9, %s859
        %p862 = scmp.eq.s32.totalorder %s49, 0
        // Predicated region
        $region117: #{tpu_custom_call.1} parent=79 // pred_check
          %p863 = pneg %p862
        $region118: #{tpu_custom_call.1} parent=79 // pred_check_branch
          %865 = sbr.rel (%p863) target = $region120
        $region119: #{tpu_custom_call.1} parent=79 // pred_region
          %v866 = vld [vmem:[%s679] sm:$0xff]
          %vm867 = vcmask 261120
          %868 = vst.msk [vmem:[#allocation2] sm:$0xff] %vm867, %v866
        $region120: #{tpu_custom_call.1} parent=79 // pred_fallthru
          _
        %v869 = vld [vmem:[#allocation2] sm:$0xff]
        %v870 = vpack.c.bf16 %v869, %v869
        %v871 = vld [vmem:[%s845] sm:$0xf]
        %v872 = vld [vmem:[%s845 + $0x4] sm:$0xf]
        %v873 = vld [vmem:[%s845 + $0x8] sm:$0xf]
        %v874 = vld [vmem:[%s845 + $0xc] sm:$0xf]
        %v875 = vld [vmem:[%s687] sm:$0x1]
        %v877 = vlaneseq
        %v878 = vshrl.u32 %v877, 7
        %v879 = vsub.s32 0, %v878
        %v880 = vrot.slane %v875, %v879
        %v886 = vunpack.c.l.b16 %v871
        %v887 = vunpack.c.l.b16 %v872
        %v888 = vunpack.c.l.b16 %v873
        %v889 = vunpack.c.l.b16 %v874
        %v890 = vpack.c.b16 %v887, %v886
        %v891 = vpack.c.b16 %v889, %v888
        %vm894 = vcmask 261120
        %v896 = vsel %vm894, %v870, 0
        %898 = vmatprep.subr.bf16.mxu0 0
        %899 = vmatpush1.bf16.msra.mxu0 %v890
        %900 = vmatprep.subr.bf16.mxu0 0
        %901 = vmatpush1.bf16.msra.mxu0 %v891
        %902 = vmatprep.subr.bf16.mxu0 0
        %903 = vmatpush1.bf16.msra.mxu0 0
        %904 = vmatprep.subr.bf16.mxu0 0
        %905 = vmatpush1.bf16.msra.mxu0 0
        %906 = vmatprep.subr.bf16.mxu0 0
        %907 = vmatpush1.bf16.msra.mxu0 0
        %908 = vmatprep.subr.bf16.mxu0 0
        %909 = vmatpush1.bf16.msra.mxu0 0
        %910 = vmatprep.subr.bf16.mxu0 0
        %911 = vmatpush1.bf16.msra.mxu0 0
        %912 = vmatprep.subr.bf16.mxu0 0
        %913 = vmatpush1.bf16.msra.mxu0 0
        %914 = vmatprep.subr.bf16.mxu0 0
        %915 = vmatpush1.bf16.msra.mxu0 0
        %916 = vmatprep.subr.bf16.mxu0 0
        %917 = vmatpush1.bf16.msra.mxu0 0
        %918 = vmatprep.subr.bf16.mxu0 0
        %919 = vmatpush1.bf16.msra.mxu0 0
        %920 = vmatprep.subr.bf16.mxu0 0
        %921 = vmatpush1.bf16.msra.mxu0 0
        %922 = vmatprep.subr.bf16.mxu0 0
        %923 = vmatpush1.bf16.msra.mxu0 0
        %924 = vmatprep.subr.bf16.mxu0 0
        %925 = vmatpush1.bf16.msra.mxu0 0
        %926 = vmatprep.subr.bf16.mxu0 0
        %927 = vmatpush1.bf16.msra.mxu0 0
        %928 = vmatprep.subr.bf16.mxu0 0
        %929 = vmatpush1.bf16.msra.mxu0 0
        %930 = vmatprep.mubr.bf16.mxu0 0
        %931 = vmatmul.mubr.bf16.gmra.mrb[0].mxu0 %v896
        %v932 = vpop.f32.mrb[0].mxu0
        %v933 = vadd.f32 %v880, %v932
        %v934 = vpop.f32.mrb[0].mxu0
        %v935 = vpop.f32.mrb[0].mxu0
        %v936 = vpop.f32.mrb[0].mxu0
        %937 = vdwg.mxu0
        %v938 = vpack.c.bf16 %v933, %v933
        %940 = vrot.lane.b32.xlu0 %v938, 96
        %v941 = vpop.permute.xlu0 %940
        %vm942 = vcmask 64512
        %v944 = vsel %vm942, %v938, 0
        %v947 = vsel %vm942, %v941, 0
        %949 = vmatprep.subr.bf16.mxu0 0
        %950 = vmatpush1.bf16.xpose.msra.mxu0 %v947
        %951 = vmatprep.subr.bf16.mxu0 0
        %952 = vmatpush1.bf16.xpose.msra.mxu0 0
        %953 = vmatprep.subr.bf16.mxu0 0
        %954 = vmatpush1.bf16.xpose.msra.mxu0 0
        %955 = vmatprep.subr.bf16.mxu0 0
        %956 = vmatpush1.bf16.xpose.msra.mxu0 0
        %957 = vmatprep.subr.bf16.mxu0 0
        %958 = vmatpush1.bf16.xpose.msra.mxu0 0
        %959 = vmatprep.subr.bf16.mxu0 0
        %960 = vmatpush1.bf16.xpose.msra.mxu0 0
        %961 = vmatprep.subr.bf16.mxu0 0
        %962 = vmatpush1.bf16.xpose.msra.mxu0 0
        %963 = vmatprep.subr.bf16.mxu0 0
        %964 = vmatpush1.bf16.xpose.msra.mxu0 0
        %965 = vmatprep.subr.bf16.mxu0 0
        %966 = vmatpush1.bf16.xpose.msra.mxu0 0
        %967 = vmatprep.subr.bf16.mxu0 0
        %968 = vmatpush1.bf16.xpose.msra.mxu0 0
        %969 = vmatprep.subr.bf16.mxu0 0
        %970 = vmatpush1.bf16.xpose.msra.mxu0 0
        %971 = vmatprep.subr.bf16.mxu0 0
        %972 = vmatpush1.bf16.xpose.msra.mxu0 0
        %973 = vmatprep.subr.bf16.mxu0 0
        %974 = vmatpush1.bf16.xpose.msra.mxu0 0
        %975 = vmatprep.subr.bf16.mxu0 0
        %976 = vmatpush1.bf16.xpose.msra.mxu0 0
        %977 = vmatprep.subr.bf16.mxu0 0
        %978 = vmatpush1.bf16.xpose.msra.mxu0 0
        %979 = vmatprep.subr.bf16.mxu0 0
        %980 = vmatpush1.bf16.xpose.msra.mxu0 0
        %981 = vmatprep.mubr.bf16.mxu0 0
        %982 = vmatmul.mubr.bf16.gmra.mrb[0].mxu0 %v944
        %v983 = vpop.f32.mrb[0].mxu0
        %v984 = vadd.f32 0.0, %v983
        %v985 = vpop.f32.mrb[0].mxu0
        %v986 = vpop.f32.mrb[0].mxu0
        %v987 = vpop.f32.mrb[0].mxu0
        %988 = vdwg.mxu0
        %v989 = vmul.f32 %v984, 0.35355338
        %v990 = vsel %vm942, %v989, -inf
        %991 = vmax.xlane.f32.xlu0 %v990
        %v992 = vpop.xlane.xlu0 %991
        %v993 = vsub.f32 %v989, %v992
        %v994 = vmul.f32 %v993, 1.442695
        %v995 = vpow.pop %v994
        %v996 = vsel %vm942, %v995, 0.0
        %997 = vadd.xlane.f32.xlu0 %v996
        %v998 = vpop.xlane.xlu0 %997
        %v999 = vrcp.pop %v998
        %v1000 = vmul.f32 %v995, %v999
        %v1001 = vpack.c.bf16 %v1000, %v1000
        %1002 = vrot.lane.b32.xlu0 %v938, 64
        %v1003 = vpop.permute.xlu0 %1002
        %v1005 = vsel %vm942, %v1001, 0
        %vm1007 = vcmask 1043456
        %v1009 = vsel %vm1007, %v1003, 0
        %1011 = vmatprep.subr.bf16.mxu0 0
        %1012 = vmatpush1.bf16.msra.mxu0 %v1009
        %1013 = vmatprep.subr.bf16.mxu0 0
        %1014 = vmatpush1.bf16.msra.mxu0 0
        %1015 = vmatprep.subr.bf16.mxu0 0
        %1016 = vmatpush1.bf16.msra.mxu0 0
        %1017 = vmatprep.subr.bf16.mxu0 0
        %1018 = vmatpush1.bf16.msra.mxu0 0
        %1019 = vmatprep.subr.bf16.mxu0 0
        %1020 = vmatpush1.bf16.msra.mxu0 0
        %1021 = vmatprep.subr.bf16.mxu0 0
        %1022 = vmatpush1.bf16.msra.mxu0 0
        %1023 = vmatprep.subr.bf16.mxu0 0
        %1024 = vmatpush1.bf16.msra.mxu0 0
        %1025 = vmatprep.subr.bf16.mxu0 0
        %1026 = vmatpush1.bf16.msra.mxu0 0
        %1027 = vmatprep.subr.bf16.mxu0 0
        %1028 = vmatpush1.bf16.msra.mxu0 0
        %1029 = vmatprep.subr.bf16.mxu0 0
        %1030 = vmatpush1.bf16.msra.mxu0 0
        %1031 = vmatprep.subr.bf16.mxu0 0
        %1032 = vmatpush1.bf16.msra.mxu0 0
        %1033 = vmatprep.subr.bf16.mxu0 0
        %1034 = vmatpush1.bf16.msra.mxu0 0
        %1035 = vmatprep.subr.bf16.mxu0 0
        %1036 = vmatpush1.bf16.msra.mxu0 0
        %1037 = vmatprep.subr.bf16.mxu0 0
        %1038 = vmatpush1.bf16.msra.mxu0 0
        %1039 = vmatprep.subr.bf16.mxu0 0
        %1040 = vmatpush1.bf16.msra.mxu0 0
        %1041 = vmatprep.subr.bf16.mxu0 0
        %1042 = vmatpush1.bf16.msra.mxu0 0
        %1043 = vmatprep.mubr.bf16.mxu0 0
        %1044 = vmatmul.mubr.bf16.gmra.mrb[0].mxu0 %v1005
        %v1045 = vpop.f32.mrb[0].mxu0
        %v1046 = vadd.f32 0.0, %v1045
        %v1047 = vpop.f32.mrb[0].mxu0
        %v1048 = vpop.f32.mrb[0].mxu0
        %v1049 = vpop.f32.mrb[0].mxu0
        %1050 = vdwg.mxu0
        %1051 = vrot.lane.b32.xlu0 %v938, 120
        %v1052 = vpop.permute.xlu0 %1051
        %1053 = vrot.lane.b32.xlu0 %v938, 88
        %v1054 = vpop.permute.xlu0 %1053
        %v1056 = vsel %vm942, %v1052, 0
        %v1059 = vsel %vm942, %v1054, 0
        %1061 = vmatprep.subr.bf16.mxu0 0
        %1062 = vmatpush1.bf16.xpose.msra.mxu0 %v1059
        %1063 = vmatprep.subr.bf16.mxu0 0
        %1064 = vmatpush1.bf16.xpose.msra.mxu0 0
        %1065 = vmatprep.subr.bf16.mxu0 0
        %1066 = vmatpush1.bf16.xpose.msra.mxu0 0
        %1067 = vmatprep.subr.bf16.mxu0 0
        %1068 = vmatpush1.bf16.xpose.msra.mxu0 0
        %1069 = vmatprep.subr.bf16.mxu0 0
        %1070 = vmatpush1.bf16.xpose.msra.mxu0 0
        %1071 = vmatprep.subr.bf16.mxu0 0
        %1072 = vmatpush1.bf16.xpose.msra.mxu0 0
        %1073 = vmatprep.subr.bf16.mxu0 0
        %1074 = vmatpush1.bf16.xpose.msra.mxu0 0
        %1075 = vmatprep.subr.bf16.mxu0 0
        %1076 = vmatpush1.bf16.xpose.msra.mxu0 0
        %1077 = vmatprep.subr.bf16.mxu0 0
        %1078 = vmatpush1.bf16.xpose.msra.mxu0 0
        %1079 = vmatprep.subr.bf16.mxu0 0
        %1080 = vmatpush1.bf16.xpose.msra.mxu0 0
        %1081 = vmatprep.subr.bf16.mxu0 0
        %1082 = vmatpush1.bf16.xpose.msra.mxu0 0
        %1083 = vmatprep.subr.bf16.mxu0 0
        %1084 = vmatpush1.bf16.xpose.msra.mxu0 0
        %1085 = vmatprep.subr.bf16.mxu0 0
        %1086 = vmatpush1.bf16.xpose.msra.mxu0 0
        %1087 = vmatprep.subr.bf16.mxu0 0
        %1088 = vmatpush1.bf16.xpose.msra.mxu0 0
        %1089 = vmatprep.subr.bf16.mxu0 0
        %1090 = vmatpush1.bf16.xpose.msra.mxu0 0
        %1091 = vmatprep.subr.bf16.mxu0 0
        %1092 = vmatpush1.bf16.xpose.msra.mxu0 0
        %1093 = vmatprep.mubr.bf16.mxu0 0
        %1094 = vmatmul.mubr.bf16.gmra.mrb[0].mxu0 %v1056
        %v1095 = vpop.f32.mrb[0].mxu0
        %v1096 = vadd.f32 0.0, %v1095
        %v1097 = vpop.f32.mrb[0].mxu0
        %v1098 = vpop.f32.mrb[0].mxu0
        %v1099 = vpop.f32.mrb[0].mxu0
        %1100 = vdwg.mxu0
        %v1101 = vmul.f32 %v1096, 0.35355338
        %v1102 = vsel %vm942, %v1101, -inf
        %1103 = vmax.xlane.f32.xlu0 %v1102
        %v1104 = vpop.xlane.xlu0 %1103
        %v1105 = vsub.f32 %v1101, %v1104
        %v1106 = vmul.f32 %v1105, 1.442695
        %v1107 = vpow.pop %v1106
        %v1108 = vsel %vm942, %v1107, 0.0
        %1109 = vadd.xlane.f32.xlu0 %v1108
        %v1110 = vpop.xlane.xlu0 %1109
        %v1111 = vrcp.pop %v1110
        %v1112 = vmul.f32 %v1107, %v1111
        %v1113 = vpack.c.bf16 %v1112, %v1112
        %1114 = vrot.lane.b32.xlu0 %v938, 56
        %v1115 = vpop.permute.xlu0 %1114
        %v1117 = vsel %vm942, %v1113, 0
        %v1120 = vsel %vm1007, %v1115, 0
        %1122 = vmatprep.subr.bf16.mxu0 0
        %1123 = vmatpush1.bf16.msra.mxu0 %v1120
        %1124 = vmatprep.subr.bf16.mxu0 0
        %1125 = vmatpush1.bf16.msra.mxu0 0
        %1126 = vmatprep.subr.bf16.mxu0 0
        %1127 = vmatpush1.bf16.msra.mxu0 0
        %1128 = vmatprep.subr.bf16.mxu0 0
        %1129 = vmatpush1.bf16.msra.mxu0 0
        %1130 = vmatprep.subr.bf16.mxu0 0
        %1131 = vmatpush1.bf16.msra.mxu0 0
        %1132 = vmatprep.subr.bf16.mxu0 0
        %1133 = vmatpush1.bf16.msra.mxu0 0
        %1134 = vmatprep.subr.bf16.mxu0 0
        %1135 = vmatpush1.bf16.msra.mxu0 0
        %1136 = vmatprep.subr.bf16.mxu0 0
        %1137 = vmatpush1.bf16.msra.mxu0 0
        %1138 = vmatprep.subr.bf16.mxu0 0
        %1139 = vmatpush1.bf16.msra.mxu0 0
        %1140 = vmatprep.subr.bf16.mxu0 0
        %1141 = vmatpush1.bf16.msra.mxu0 0
        %1142 = vmatprep.subr.bf16.mxu0 0
        %1143 = vmatpush1.bf16.msra.mxu0 0
        %1144 = vmatprep.subr.bf16.mxu0 0
        %1145 = vmatpush1.bf16.msra.mxu0 0
        %1146 = vmatprep.subr.bf16.mxu0 0
        %1147 = vmatpush1.bf16.msra.mxu0 0
        %1148 = vmatprep.subr.bf16.mxu0 0
        %1149 = vmatpush1.bf16.msra.mxu0 0
        %1150 = vmatprep.subr.bf16.mxu0 0
        %1151 = vmatpush1.bf16.msra.mxu0 0
        %1152 = vmatprep.subr.bf16.mxu0 0
        %1153 = vmatpush1.bf16.msra.mxu0 0
        %1154 = vmatprep.mubr.bf16.mxu0 0
        %1155 = vmatmul.mubr.bf16.gmra.mrb[0].mxu0 %v1117
        %v1156 = vpop.f32.mrb[0].mxu0
        %v1157 = vadd.f32 0.0, %v1156
        %v1158 = vpop.f32.mrb[0].mxu0
        %v1159 = vpop.f32.mrb[0].mxu0
        %v1160 = vpop.f32.mrb[0].mxu0
        %1161 = vdwg.mxu0
        %1162 = vrot.lane.b32.xlu0 %v938, 112
        %v1163 = vpop.permute.xlu0 %1162
        %1164 = vrot.lane.b32.xlu0 %v938, 80
        %v1165 = vpop.permute.xlu0 %1164
        %v1167 = vsel %vm942, %v1163, 0
        %v1170 = vsel %vm942, %v1165, 0
        %1172 = vmatprep.subr.bf16.mxu0 0
        %1173 = vmatpush1.bf16.xpose.msra.mxu0 %v1170
        %1174 = vmatprep.subr.bf16.mxu0 0
        %1175 = vmatpush1.bf16.xpose.msra.mxu0 0
        %1176 = vmatprep.subr.bf16.mxu0 0
        %1177 = vmatpush1.bf16.xpose.msra.mxu0 0
        %1178 = vmatprep.subr.bf16.mxu0 0
        %1179 = vmatpush1.bf16.xpose.msra.mxu0 0
        %1180 = vmatprep.subr.bf16.mxu0 0
        %1181 = vmatpush1.bf16.xpose.msra.mxu0 0
        %1182 = vmatprep.subr.bf16.mxu0 0
        %1183 = vmatpush1.bf16.xpose.msra.mxu0 0
        %1184 = vmatprep.subr.bf16.mxu0 0
        %1185 = vmatpush1.bf16.xpose.msra.mxu0 0
        %1186 = vmatprep.subr.bf16.mxu0 0
        %1187 = vmatpush1.bf16.xpose.msra.mxu0 0
        %1188 = vmatprep.subr.bf16.mxu0 0
        %1189 = vmatpush1.bf16.xpose.msra.mxu0 0
        %1190 = vmatprep.subr.bf16.mxu0 0
        %1191 = vmatpush1.bf16.xpose.msra.mxu0 0
        %1192 = vmatprep.subr.bf16.mxu0 0
        %1193 = vmatpush1.bf16.xpose.msra.mxu0 0
        %1194 = vmatprep.subr.bf16.mxu0 0
        %1195 = vmatpush1.bf16.xpose.msra.mxu0 0
        %1196 = vmatprep.subr.bf16.mxu0 0
        %1197 = vmatpush1.bf16.xpose.msra.mxu0 0
        %1198 = vmatprep.subr.bf16.mxu0 0
        %1199 = vmatpush1.bf16.xpose.msra.mxu0 0
        %1200 = vmatprep.subr.bf16.mxu0 0
        %1201 = vmatpush1.bf16.xpose.msra.mxu0 0
        %1202 = vmatprep.subr.bf16.mxu0 0
        %1203 = vmatpush1.bf16.xpose.msra.mxu0 0
        %1204 = vmatprep.mubr.bf16.mxu0 0
        %1205 = vmatmul.mubr.bf16.gmra.mrb[0].mxu0 %v1167
        %v1206 = vpop.f32.mrb[0].mxu0
        %v1207 = vadd.f32 0.0, %v1206
        %v1208 = vpop.f32.mrb[0].mxu0
        %v1209 = vpop.f32.mrb[0].mxu0
        %v1210 = vpop.f32.mrb[0].mxu0
        %1211 = vdwg.mxu0
        %v1212 = vmul.f32 %v1207, 0.35355338
        %v1213 = vsel %vm942, %v1212, -inf
        %1214 = vmax.xlane.f32.xlu0 %v1213
        %v1215 = vpop.xlane.xlu0 %1214
        %v1216 = vsub.f32 %v1212, %v1215
        %v1217 = vmul.f32 %v1216, 1.442695
        %v1218 = vpow.pop %v1217
        %v1219 = vsel %vm942, %v1218, 0.0
        %1220 = vadd.xlane.f32.xlu0 %v1219
        %v1221 = vpop.xlane.xlu0 %1220
        %v1222 = vrcp.pop %v1221
        %v1223 = vmul.f32 %v1218, %v1222
        %v1224 = vpack.c.bf16 %v1223, %v1223
        %1225 = vrot.lane.b32.xlu0 %v938, 48
        %v1226 = vpop.permute.xlu0 %1225
        %v1228 = vsel %vm942, %v1224, 0
        %v1231 = vsel %vm1007, %v1226, 0
        %1233 = vmatprep.subr.bf16.mxu0 0
        %1234 = vmatpush1.bf16.msra.mxu0 %v1231
        %1235 = vmatprep.subr.bf16.mxu0 0
        %1236 = vmatpush1.bf16.msra.mxu0 0
        %1237 = vmatprep.subr.bf16.mxu0 0
        %1238 = vmatpush1.bf16.msra.mxu0 0
        %1239 = vmatprep.subr.bf16.mxu0 0
        %1240 = vmatpush1.bf16.msra.mxu0 0
        %1241 = vmatprep.subr.bf16.mxu0 0
        %1242 = vmatpush1.bf16.msra.mxu0 0
        %1243 = vmatprep.subr.bf16.mxu0 0
        %1244 = vmatpush1.bf16.msra.mxu0 0
        %1245 = vmatprep.subr.bf16.mxu0 0
        %1246 = vmatpush1.bf16.msra.mxu0 0
        %1247 = vmatprep.subr.bf16.mxu0 0
        %1248 = vmatpush1.bf16.msra.mxu0 0
        %1249 = vmatprep.subr.bf16.mxu0 0
        %1250 = vmatpush1.bf16.msra.mxu0 0
        %1251 = vmatprep.subr.bf16.mxu0 0
        %1252 = vmatpush1.bf16.msra.mxu0 0
        %1253 = vmatprep.subr.bf16.mxu0 0
        %1254 = vmatpush1.bf16.msra.mxu0 0
        %1255 = vmatprep.subr.bf16.mxu0 0
        %1256 = vmatpush1.bf16.msra.mxu0 0
        %1257 = vmatprep.subr.bf16.mxu0 0
        %1258 = vmatpush1.bf16.msra.mxu0 0
        %1259 = vmatprep.subr.bf16.mxu0 0
        %1260 = vmatpush1.bf16.msra.mxu0 0
        %1261 = vmatprep.subr.bf16.mxu0 0
        %1262 = vmatpush1.bf16.msra.mxu0 0
        %1263 = vmatprep.subr.bf16.mxu0 0
        %1264 = vmatpush1.bf16.msra.mxu0 0
        %1265 = vmatprep.mubr.bf16.mxu0 0
        %1266 = vmatmul.mubr.bf16.gmra.mrb[0].mxu0 %v1228
        %v1267 = vpop.f32.mrb[0].mxu0
        %v1268 = vadd.f32 0.0, %v1267
        %v1269 = vpop.f32.mrb[0].mxu0
        %v1270 = vpop.f32.mrb[0].mxu0
        %v1271 = vpop.f32.mrb[0].mxu0
        %1272 = vdwg.mxu0
        %1273 = vrot.lane.b32.xlu0 %v938, 104
        %v1274 = vpop.permute.xlu0 %1273
        %1275 = vrot.lane.b32.xlu0 %v938, 72
        %v1276 = vpop.permute.xlu0 %1275
        %v1278 = vsel %vm942, %v1274, 0
        %v1281 = vsel %vm942, %v1276, 0
        %1283 = vmatprep.subr.bf16.mxu0 0
        %1284 = vmatpush1.bf16.xpose.msra.mxu0 %v1281
        %1285 = vmatprep.subr.bf16.mxu0 0
        %1286 = vmatpush1.bf16.xpose.msra.mxu0 0
        %1287 = vmatprep.subr.bf16.mxu0 0
        %1288 = vmatpush1.bf16.xpose.msra.mxu0 0
        %1289 = vmatprep.subr.bf16.mxu0 0
        %1290 = vmatpush1.bf16.xpose.msra.mxu0 0
        %1291 = vmatprep.subr.bf16.mxu0 0
        %1292 = vmatpush1.bf16.xpose.msra.mxu0 0
        %1293 = vmatprep.subr.bf16.mxu0 0
        %1294 = vmatpush1.bf16.xpose.msra.mxu0 0
        %1295 = vmatprep.subr.bf16.mxu0 0
        %1296 = vmatpush1.bf16.xpose.msra.mxu0 0
        %1297 = vmatprep.subr.bf16.mxu0 0
        %1298 = vmatpush1.bf16.xpose.msra.mxu0 0
        %1299 = vmatprep.subr.bf16.mxu0 0
        %1300 = vmatpush1.bf16.xpose.msra.mxu0 0
        %1301 = vmatprep.subr.bf16.mxu0 0
        %1302 = vmatpush1.bf16.xpose.msra.mxu0 0
        %1303 = vmatprep.subr.bf16.mxu0 0
        %1304 = vmatpush1.bf16.xpose.msra.mxu0 0
        %1305 = vmatprep.subr.bf16.mxu0 0
        %1306 = vmatpush1.bf16.xpose.msra.mxu0 0
        %1307 = vmatprep.subr.bf16.mxu0 0
        %1308 = vmatpush1.bf16.xpose.msra.mxu0 0
        %1309 = vmatprep.subr.bf16.mxu0 0
        %1310 = vmatpush1.bf16.xpose.msra.mxu0 0
        %1311 = vmatprep.subr.bf16.mxu0 0
        %1312 = vmatpush1.bf16.xpose.msra.mxu0 0
        %1313 = vmatprep.subr.bf16.mxu0 0
        %1314 = vmatpush1.bf16.xpose.msra.mxu0 0
        %1315 = vmatprep.mubr.bf16.mxu0 0
        %1316 = vmatmul.mubr.bf16.gmra.mrb[0].mxu0 %v1278
        %v1317 = vpop.f32.mrb[0].mxu0
        %v1318 = vadd.f32 0.0, %v1317
        %v1319 = vpop.f32.mrb[0].mxu0
        %v1320 = vpop.f32.mrb[0].mxu0
        %v1321 = vpop.f32.mrb[0].mxu0
        %1322 = vdwg.mxu0
        %v1323 = vmul.f32 %v1318, 0.35355338
        %v1324 = vsel %vm942, %v1323, -inf
        %1325 = vmax.xlane.f32.xlu0 %v1324
        %v1326 = vpop.xlane.xlu0 %1325
        %v1327 = vsub.f32 %v1323, %v1326
        %v1328 = vmul.f32 %v1327, 1.442695
        %v1329 = vpow.pop %v1328
        %v1330 = vsel %vm942, %v1329, 0.0
        %1331 = vadd.xlane.f32.xlu0 %v1330
        %v1332 = vpop.xlane.xlu0 %1331
        %v1333 = vrcp.pop %v1332
        %v1334 = vmul.f32 %v1329, %v1333
        %v1335 = vpack.c.bf16 %v1334, %v1334
        %1336 = vrot.lane.b32.xlu0 %v938, 40
        %v1337 = vpop.permute.xlu0 %1336
        %v1339 = vsel %vm942, %v1335, 0
        %v1342 = vsel %vm1007, %v1337, 0
        %1344 = vmatprep.subr.bf16.mxu0 0
        %1345 = vmatpush1.bf16.msra.mxu0 %v1342
        %1346 = vmatprep.subr.bf16.mxu0 0
        %1347 = vmatpush1.bf16.msra.mxu0 0
        %1348 = vmatprep.subr.bf16.mxu0 0
        %1349 = vmatpush1.bf16.msra.mxu0 0
        %1350 = vmatprep.subr.bf16.mxu0 0
        %1351 = vmatpush1.bf16.msra.mxu0 0
        %1352 = vmatprep.subr.bf16.mxu0 0
        %1353 = vmatpush1.bf16.msra.mxu0 0
        %1354 = vmatprep.subr.bf16.mxu0 0
        %1355 = vmatpush1.bf16.msra.mxu0 0
        %1356 = vmatprep.subr.bf16.mxu0 0
        %1357 = vmatpush1.bf16.msra.mxu0 0
        %1358 = vmatprep.subr.bf16.mxu0 0
        %1359 = vmatpush1.bf16.msra.mxu0 0
        %1360 = vmatprep.subr.bf16.mxu0 0
        %1361 = vmatpush1.bf16.msra.mxu0 0
        %1362 = vmatprep.subr.bf16.mxu0 0
        %1363 = vmatpush1.bf16.msra.mxu0 0
        %1364 = vmatprep.subr.bf16.mxu0 0
        %1365 = vmatpush1.bf16.msra.mxu0 0
        %1366 = vmatprep.subr.bf16.mxu0 0
        %1367 = vmatpush1.bf16.msra.mxu0 0
        %1368 = vmatprep.subr.bf16.mxu0 0
        %1369 = vmatpush1.bf16.msra.mxu0 0
        %1370 = vmatprep.subr.bf16.mxu0 0
        %1371 = vmatpush1.bf16.msra.mxu0 0
        %1372 = vmatprep.subr.bf16.mxu0 0
        %1373 = vmatpush1.bf16.msra.mxu0 0
        %1374 = vmatprep.subr.bf16.mxu0 0
        %1375 = vmatpush1.bf16.msra.mxu0 0
        %1376 = vmatprep.mubr.bf16.mxu0 0
        %1377 = vmatmul.mubr.bf16.gmra.mrb[0].mxu0 %v1339
        %v1378 = vpop.f32.mrb[0].mxu0
        %v1379 = vadd.f32 0.0, %v1378
        %v1380 = vpop.f32.mrb[0].mxu0
        %v1381 = vpop.f32.mrb[0].mxu0
        %v1382 = vpop.f32.mrb[0].mxu0
        %1383 = vdwg.mxu0
        %1385 = vrot.lane.b32.xlu0 %v1157, 8
        %v1386 = vpop.permute.xlu0 %1385
        %1389 = vrot.lane.b32.xlu0 %v1268, 16
        %v1390 = vpop.permute.xlu0 %1389
        %1393 = vrot.lane.b32.xlu0 %v1379, 24
        %v1394 = vpop.permute.xlu0 %1393
        %v1396 = vsel %vm942, %v1046, %v1386
        %vm1397 = vcmask 130048
        %v1398 = vsel %vm1397, %v1396, %v1390
        %vm1399 = vcmask 195584
        %v1400 = vsel %vm1399, %v1398, %v1394
        %v1401 = vpack.c.bf16 %v1400, %v1400
        %v1402 = vld [vmem:[%s850] sm:$0xf]
        %v1403 = vld [vmem:[%s850 + $0x4] sm:$0xf]
        %v1404 = vld [vmem:[%s850 + $0x8] sm:$0xf]
        %v1405 = vld [vmem:[%s850 + $0xc] sm:$0xf]
        %v1406 = vld [vmem:[%s695] sm:$0x1]
        %v1408 = vlaneseq
        %v1409 = vshrl.u32 %v1408, 7
        %v1410 = vsub.s32 0, %v1409
        %v1411 = vrot.slane %v1406, %v1410
        %v1417 = vunpack.c.l.b16 %v1402
        %v1418 = vunpack.c.l.b16 %v1403
        %v1419 = vunpack.c.l.b16 %v1404
        %v1420 = vunpack.c.l.b16 %v1405
        %v1421 = vpack.c.b16 %v1418, %v1417
        %v1422 = vpack.c.b16 %v1420, %v1419
        %v1426 = vsel %vm894, %v1401, 0
        %1428 = vmatprep.subr.bf16.mxu0 0
        %1429 = vmatpush1.bf16.msra.mxu0 %v1421
        %1430 = vmatprep.subr.bf16.mxu0 0
        %1431 = vmatpush1.bf16.msra.mxu0 %v1422
        %1432 = vmatprep.subr.bf16.mxu0 0
        %1433 = vmatpush1.bf16.msra.mxu0 0
        %1434 = vmatprep.subr.bf16.mxu0 0
        %1435 = vmatpush1.bf16.msra.mxu0 0
        %1436 = vmatprep.subr.bf16.mxu0 0
        %1437 = vmatpush1.bf16.msra.mxu0 0
        %1438 = vmatprep.subr.bf16.mxu0 0
        %1439 = vmatpush1.bf16.msra.mxu0 0
        %1440 = vmatprep.subr.bf16.mxu0 0
        %1441 = vmatpush1.bf16.msra.mxu0 0
        %1442 = vmatprep.subr.bf16.mxu0 0
        %1443 = vmatpush1.bf16.msra.mxu0 0
        %1444 = vmatprep.subr.bf16.mxu0 0
        %1445 = vmatpush1.bf16.msra.mxu0 0
        %1446 = vmatprep.subr.bf16.mxu0 0
        %1447 = vmatpush1.bf16.msra.mxu0 0
        %1448 = vmatprep.subr.bf16.mxu0 0
        %1449 = vmatpush1.bf16.msra.mxu0 0
        %1450 = vmatprep.subr.bf16.mxu0 0
        %1451 = vmatpush1.bf16.msra.mxu0 0
        %1452 = vmatprep.subr.bf16.mxu0 0
        %1453 = vmatpush1.bf16.msra.mxu0 0
        %1454 = vmatprep.subr.bf16.mxu0 0
        %1455 = vmatpush1.bf16.msra.mxu0 0
        %1456 = vmatprep.subr.bf16.mxu0 0
        %1457 = vmatpush1.bf16.msra.mxu0 0
        %1458 = vmatprep.subr.bf16.mxu0 0
        %1459 = vmatpush1.bf16.msra.mxu0 0
        %1460 = vmatprep.mubr.bf16.mxu0 0
        %1461 = vmatmul.mubr.bf16.gmra.mrb[0].mxu0 %v1426
        %v1462 = vpop.f32.mrb[0].mxu0
        %v1463 = vadd.f32 %v1411, %v1462
        %v1464 = vpop.f32.mrb[0].mxu0
        %v1465 = vpop.f32.mrb[0].mxu0
        %v1466 = vpop.f32.mrb[0].mxu0
        %1467 = vdwg.mxu0
        %v1468 = vadd.f32 %v869, %v1463
        %v1469 = vld [vmem:[%s703] sm:$0x1]
        %v1470 = vld [vmem:[%s711] sm:$0x1]
        %v1471 = vsel %vm894, %v1468, 0.0
        %1472 = vadd.xlane.f32.xlu0 %v1471
        %v1473 = vpop.xlane.xlu0 %1472
        %v1474 = vrcp.pop 32.0
        %v1475 = vmul.f32 %v1473, %v1474
        %v1476 = vmul.f32 %v1468, %v1468
        %v1477 = vsel %vm894, %v1476, 0.0
        %1478 = vadd.xlane.f32.xlu0 %v1477
        %v1479 = vpop.xlane.xlu0 %1478
        %v1480 = vmul.f32 %v1479, %v1474
        %v1481 = vmul.f32 %v1475, %v1475
        %v1482 = vsub.f32 %v1480, %v1481
        %v1483 = vmax.f32 %v1482, 0.0
        %v1484 = vsub.f32 %v1468, %v1475
        %v1485 = vadd.f32 %v1483, 1e-05
        %v1486 = vrsqrt.pop %v1485
        %v1487 = vmul.f32 %v1484, %v1486
        %v1489 = vlaneseq
        %v1490 = vshrl.u32 %v1489, 7
        %v1491 = vsub.s32 0, %v1490
        %v1492 = vrot.slane %v1469, %v1491
        %v1494 = vmul.f32 %v1487, %v1492
        %v1496 = vlaneseq
        %v1497 = vshrl.u32 %v1496, 7
        %v1498 = vsub.s32 0, %v1497
        %v1499 = vrot.slane %v1470, %v1498
        %v1501 = vadd.f32 %v1494, %v1499
        %v1502 = vpack.c.bf16 %v1501, %v1501
        %v1503 = vld [vmem:[%s855] sm:$0xf]
        %v1504 = vld [vmem:[%s855 + $0x4] sm:$0xf]
        %v1505 = vld [vmem:[%s855 + $0x8] sm:$0xf]
        %v1506 = vld [vmem:[%s855 + $0xc] sm:$0xf]
        %v1507 = vld [vmem:[%s719] sm:$0x1]
        %v1509 = vlaneseq
        %v1510 = vshrl.u32 %v1509, 7
        %v1511 = vsub.s32 0, %v1510
        %v1512 = vrot.slane %v1507, %v1511
        %v1518 = vunpack.c.l.b16 %v1503
        %v1519 = vunpack.c.l.b16 %v1504
        %v1520 = vunpack.c.l.b16 %v1505
        %v1521 = vunpack.c.l.b16 %v1506
        %v1522 = vpack.c.b16 %v1519, %v1518
        %v1523 = vpack.c.b16 %v1521, %v1520
        %v1527 = vsel %vm894, %v1502, 0
        %1529 = vmatprep.subr.bf16.mxu0 0
        %1530 = vmatpush1.bf16.msra.mxu0 %v1522
        %1531 = vmatprep.subr.bf16.mxu0 0
        %1532 = vmatpush1.bf16.msra.mxu0 %v1523
        %1533 = vmatprep.subr.bf16.mxu0 0
        %1534 = vmatpush1.bf16.msra.mxu0 0
        %1535 = vmatprep.subr.bf16.mxu0 0
        %1536 = vmatpush1.bf16.msra.mxu0 0
        %1537 = vmatprep.subr.bf16.mxu0 0
        %1538 = vmatpush1.bf16.msra.mxu0 0
        %1539 = vmatprep.subr.bf16.mxu0 0
        %1540 = vmatpush1.bf16.msra.mxu0 0
        %1541 = vmatprep.subr.bf16.mxu0 0
        %1542 = vmatpush1.bf16.msra.mxu0 0
        %1543 = vmatprep.subr.bf16.mxu0 0
        %1544 = vmatpush1.bf16.msra.mxu0 0
        %1545 = vmatprep.subr.bf16.mxu0 0
        %1546 = vmatpush1.bf16.msra.mxu0 0
        %1547 = vmatprep.subr.bf16.mxu0 0
        %1548 = vmatpush1.bf16.msra.mxu0 0
        %1549 = vmatprep.subr.bf16.mxu0 0
        %1550 = vmatpush1.bf16.msra.mxu0 0
        %1551 = vmatprep.subr.bf16.mxu0 0
        %1552 = vmatpush1.bf16.msra.mxu0 0
        %1553 = vmatprep.subr.bf16.mxu0 0
        %1554 = vmatpush1.bf16.msra.mxu0 0
        %1555 = vmatprep.subr.bf16.mxu0 0
        %1556 = vmatpush1.bf16.msra.mxu0 0
        %1557 = vmatprep.subr.bf16.mxu0 0
        %1558 = vmatpush1.bf16.msra.mxu0 0
        %1559 = vmatprep.subr.bf16.mxu0 0
        %1560 = vmatpush1.bf16.msra.mxu0 0
        %1561 = vmatprep.mubr.bf16.mxu0 0
        %1562 = vmatmul.mubr.bf16.gmra.mrb[0].mxu0 %v1527
        %v1563 = vpop.f32.mrb[0].mxu0
        %v1564 = vadd.f32 %v1512, %v1563
        %v1565 = vpop.f32.mrb[0].mxu0
        %v1566 = vpop.f32.mrb[0].mxu0
        %v1567 = vpop.f32.mrb[0].mxu0
        %1568 = vdwg.mxu0
        %v1569 = vmax.f32 %v1564, 0.0
        %v1570 = vpack.c.bf16 %v1569, %v1569
        %v1571 = vld [vmem:[%s860] sm:$0xf]
        %v1572 = vld [vmem:[%s860 + $0x4] sm:$0xf]
        %v1573 = vld [vmem:[%s860 + $0x8] sm:$0xf]
        %v1574 = vld [vmem:[%s860 + $0xc] sm:$0xf]
        %v1575 = vld [vmem:[%s860 + $0x10] sm:$0xf]
        %v1576 = vld [vmem:[%s860 + $0x14] sm:$0xf]
        %v1577 = vld [vmem:[%s860 + $0x18] sm:$0xf]
        %v1578 = vld [vmem:[%s860 + $0x1c] sm:$0xf]
        %v1579 = vld [vmem:[%s727] sm:$0x1]
        %v1581 = vlaneseq
        %v1582 = vshrl.u32 %v1581, 7
        %v1583 = vsub.s32 0, %v1582
        %v1584 = vrot.slane %v1579, %v1583
        %v1594 = vunpack.c.l.b16 %v1571
        %v1595 = vunpack.c.l.b16 %v1572
        %v1596 = vunpack.c.l.b16 %v1573
        %v1597 = vunpack.c.l.b16 %v1574
        %v1598 = vunpack.c.l.b16 %v1575
        %v1599 = vunpack.c.l.b16 %v1576
        %v1600 = vunpack.c.l.b16 %v1577
        %v1601 = vunpack.c.l.b16 %v1578
        %v1602 = vpack.c.b16 %v1595, %v1594
        %v1603 = vpack.c.b16 %v1597, %v1596
        %v1604 = vpack.c.b16 %v1599, %v1598
        %v1605 = vpack.c.b16 %v1601, %v1600
        %vm1610 = vcmask 523264
        %v1612 = vsel %vm1610, %v1570, 0
        %1614 = vmatprep.subr.bf16.mxu0 0
        %1615 = vmatpush1.bf16.msra.mxu0 %v1602
        %1616 = vmatprep.subr.bf16.mxu0 0
        %1617 = vmatpush1.bf16.msra.mxu0 %v1603
        %1618 = vmatprep.subr.bf16.mxu0 0
        %1619 = vmatpush1.bf16.msra.mxu0 %v1604
        %1620 = vmatprep.subr.bf16.mxu0 0
        %1621 = vmatpush1.bf16.msra.mxu0 %v1605
        %1622 = vmatprep.subr.bf16.mxu0 0
        %1623 = vmatpush1.bf16.msra.mxu0 0
        %1624 = vmatprep.subr.bf16.mxu0 0
        %1625 = vmatpush1.bf16.msra.mxu0 0
        %1626 = vmatprep.subr.bf16.mxu0 0
        %1627 = vmatpush1.bf16.msra.mxu0 0
        %1628 = vmatprep.subr.bf16.mxu0 0
        %1629 = vmatpush1.bf16.msra.mxu0 0
        %1630 = vmatprep.subr.bf16.mxu0 0
        %1631 = vmatpush1.bf16.msra.mxu0 0
        %1632 = vmatprep.subr.bf16.mxu0 0
        %1633 = vmatpush1.bf16.msra.mxu0 0
        %1634 = vmatprep.subr.bf16.mxu0 0
        %1635 = vmatpush1.bf16.msra.mxu0 0
        %1636 = vmatprep.subr.bf16.mxu0 0
        %1637 = vmatpush1.bf16.msra.mxu0 0
        %1638 = vmatprep.subr.bf16.mxu0 0
        %1639 = vmatpush1.bf16.msra.mxu0 0
        %1640 = vmatprep.subr.bf16.mxu0 0
        %1641 = vmatpush1.bf16.msra.mxu0 0
        %1642 = vmatprep.subr.bf16.mxu0 0
        %1643 = vmatpush1.bf16.msra.mxu0 0
        %1644 = vmatprep.subr.bf16.mxu0 0
        %1645 = vmatpush1.bf16.msra.mxu0 0
        %1646 = vmatprep.mubr.bf16.mxu0 0
        %1647 = vmatmul.mubr.bf16.gmra.mrb[0].mxu0 %v1612
        %v1648 = vpop.f32.mrb[0].mxu0
        %v1649 = vadd.f32 %v1584, %v1648
        %v1650 = vpop.f32.mrb[0].mxu0
        %v1651 = vpop.f32.mrb[0].mxu0
        %v1652 = vpop.f32.mrb[0].mxu0
        %1653 = vdwg.mxu0
        %v1654 = vadd.f32 %v1501, %v1649
        %v1655 = vld [vmem:[%s735] sm:$0x1]
        %v1656 = vld [vmem:[%s743] sm:$0x1]
        %v1657 = vsel %vm894, %v1654, 0.0
        %1658 = vadd.xlane.f32.xlu0 %v1657
        %v1659 = vpop.xlane.xlu0 %1658
        %v1660 = vmul.f32 %v1659, %v1474
        %v1661 = vmul.f32 %v1654, %v1654
        %v1662 = vsel %vm894, %v1661, 0.0
        %1663 = vadd.xlane.f32.xlu0 %v1662
        %v1664 = vpop.xlane.xlu0 %1663
        %v1665 = vmul.f32 %v1664, %v1474
        %v1666 = vmul.f32 %v1660, %v1660
        %v1667 = vsub.f32 %v1665, %v1666
        %v1668 = vmax.f32 %v1667, 0.0
        %v1669 = vsub.f32 %v1654, %v1660
        %v1670 = vadd.f32 %v1668, 1e-05
        %v1671 = vrsqrt.pop %v1670
        %v1672 = vmul.f32 %v1669, %v1671
        %v1674 = vlaneseq
        %v1675 = vshrl.u32 %v1674, 7
        %v1676 = vsub.s32 0, %v1675
        %v1677 = vrot.slane %v1655, %v1676
        %v1679 = vmul.f32 %v1672, %v1677
        %v1681 = vlaneseq
        %v1682 = vshrl.u32 %v1681, 7
        %v1683 = vsub.s32 0, %v1682
        %v1684 = vrot.slane %v1656, %v1683
        %v1686 = vadd.f32 %v1679, %v1684
        %1687 = vst.msk [vmem:[#allocation2] sm:$0xff] %vm894, %v1686
        %p1688 = scmp.eq.s32.totalorder %s49, 1
        // Predicated region
        $region121: #{tpu_custom_call.1} parent=79 // pred_check
          %p1689 = pneg %p1688
        $region122: #{tpu_custom_call.1} parent=79 // pred_check_branch
          %1691 = sbr.rel (%p1689) target = $region124
        $region123: #{tpu_custom_call.1} parent=79 // pred_region
          %v1692 = vsel %vm894, %v1686, 0.0
          %v1693 = vrot.slane %v1692, 4
          %v1694 = vadd.f32 %v1692, %v1693
          %v1695 = vrot.slane %v1694, 2
          %v1696 = vadd.f32 %v1694, %v1695
          %v1697 = vrot.slane %v1696, 1
          %v1698 = vadd.f32 %v1696, %v1697
          %v1699 = vrcp.pop 8.0
          %v1700 = vmul.f32 %v1698, %v1699
          %v1701 = vpack.c.bf16 %v1700, %v1700
          %v1702 = vld [vmem:[%s13] sm:$0xf]
          %v1703 = vld [vmem:[%s13 + $0x4] sm:$0xf]
          %v1704 = vld [vmem:[%s13 + $0x8] sm:$0xf]
          %v1705 = vld [vmem:[%s13 + $0xc] sm:$0xf]
          %v1706 = vld [vmem:[%s14] sm:$0x1]
          %v1711 = vunpack.c.l.b16 %v1702
          %v1712 = vunpack.c.l.b16 %v1703
          %v1713 = vunpack.c.l.b16 %v1704
          %v1714 = vunpack.c.l.b16 %v1705
          %v1715 = vpack.c.b16 %v1712, %v1711
          %v1716 = vpack.c.b16 %v1714, %v1713
          %v1720 = vsel %vm894, %v1701, 0
          %1722 = vmatprep.subr.bf16.mxu0 0
          %1723 = vmatpush1.bf16.msra.mxu0 %v1715
          %1724 = vmatprep.subr.bf16.mxu0 0
          %1725 = vmatpush1.bf16.msra.mxu0 %v1716
          %1726 = vmatprep.subr.bf16.mxu0 0
          %1727 = vmatpush1.bf16.msra.mxu0 0
          %1728 = vmatprep.subr.bf16.mxu0 0
          %1729 = vmatpush1.bf16.msra.mxu0 0
          %1730 = vmatprep.subr.bf16.mxu0 0
          %1731 = vmatpush1.bf16.msra.mxu0 0
          %1732 = vmatprep.subr.bf16.mxu0 0
          %1733 = vmatpush1.bf16.msra.mxu0 0
          %1734 = vmatprep.subr.bf16.mxu0 0
          %1735 = vmatpush1.bf16.msra.mxu0 0
          %1736 = vmatprep.subr.bf16.mxu0 0
          %1737 = vmatpush1.bf16.msra.mxu0 0
          %1738 = vmatprep.subr.bf16.mxu0 0
          %1739 = vmatpush1.bf16.msra.mxu0 0
          %1740 = vmatprep.subr.bf16.mxu0 0
          %1741 = vmatpush1.bf16.msra.mxu0 0
          %1742 = vmatprep.subr.bf16.mxu0 0
          %1743 = vmatpush1.bf16.msra.mxu0 0
          %1744 = vmatprep.subr.bf16.mxu0 0
          %1745 = vmatpush1.bf16.msra.mxu0 0
          %1746 = vmatprep.subr.bf16.mxu0 0
          %1747 = vmatpush1.bf16.msra.mxu0 0
          %1748 = vmatprep.subr.bf16.mxu0 0
          %1749 = vmatpush1.bf16.msra.mxu0 0
          %1750 = vmatprep.subr.bf16.mxu0 0
          %1751 = vmatpush1.bf16.msra.mxu0 0
          %1752 = vmatprep.subr.bf16.mxu0 0
          %1753 = vmatpush1.bf16.msra.mxu0 0
          %1754 = vmatprep.mubr.bf16.mxu0 0
          %1755 = vmatmul.mubr.bf16.gmra.mrb[0].mxu0 %v1720
          %v1756 = vpop.f32.mrb[0].mxu0
          %v1757 = vadd.f32 %v1706, %v1756
          %v1758 = vpop.f32.mrb[0].mxu0
          %v1759 = vpop.f32.mrb[0].mxu0
          %v1760 = vpop.f32.mrb[0].mxu0
          %1761 = vdwg.mxu0
          %v1762 = vsub.f32 0.0, %v1757
          %v1763 = vmul.f32 %v1762, 1.442695
          %v1764 = vpow.pop %v1763
          %v1765 = vadd.f32 %v1764, 1.0
          %v1766 = vrcp.pop %v1765
          %v1767 = vmul.f32 1.0, %v1766
          %1768 = vst [vmem:[%s840] sm:$0x1] %v1767
        $region124: #{tpu_custom_call.1} parent=79 // pred_fallthru
          _
        %s1769 = sand.u32 %s444, 1
        %s1770 = scalar_lea.sflag [#allocation5], %s1769
        %s1771 = sand.u32 %s444, 1
        %s1772 = scalar_lea.vmem [#allocation18], %s1771
        // Predicated region
        $region125: #{tpu_custom_call.1} parent=79 // pred_check
          %p1773 = pneg %p454
        $region126: #{tpu_custom_call.1} parent=79 // pred_check_branch
          %1775 = sbr.rel (%p1773) target = $region128
        $region127: #{tpu_custom_call.1} parent=79 // pred_region
          %s1777 = ssub.s32 16, 16
          %1778 = vsyncadd %s1770, %s1777
          %s1779 = smul.addr %s48, 16
          %s1780 = scalar_lea.hbm %s15, %s1779
          %s1782 = sshll.u32 %s1772, 4
          %s1783 = int_to_ptr.vmem [resolvable:$true] %s1782
          %1785 = dma.vmem_to_hbm [thread:$0]  %s1783, 16, %s1780, %s1770
        $region128: #{tpu_custom_call.1} parent=79 // pred_fallthru
          _
      $region80: #{tpu_custom_call.1} parent=5 // pred_fallthru
        _
      %p1786 = scmp.le.s32.totalorder 2, %s39
      // Predicated region
      $region129: #{tpu_custom_call.1} parent=5 // pred_check
        %p1787 = pneg %p1786
      $region130: #{tpu_custom_call.1} parent=5 // pred_check_branch
        %1789 = sbr.rel (%p1787) target = $region132
      $region131: #{tpu_custom_call.1} parent=5 // pred_region
        %s1790 = ssub.s32 %s39, 2
        // Predicated region
        $region133: #{tpu_custom_call.1} parent=131 // pred_check
          %p1791 = pneg %p460
        $region134: #{tpu_custom_call.1} parent=131 // pred_check_branch
          %1793 = sbr.rel (%p1791) target = $region136
        $region135: #{tpu_custom_call.1} parent=131 // pred_region
          %s1794 = sand.u32 %s445, 1
          %s1795 = scalar_lea.sflag [#allocation5], %s1794
          %s1796 = sand.u32 %s445, 1
          %s1797 = scalar_lea.vmem [#allocation18], %s1796
          %1798 = dma.done %s1795, 16
        $region136: #{tpu_custom_call.1} parent=131 // pred_fallthru
          _
      $region132: #{tpu_custom_call.1} parent=5 // pred_fallthru
        _
    $region6: #{tpu_custom_call.1} parent=1 // loop_footer
      %s43 = sadd.s32 1, %s39
    $region7: #{tpu_custom_call.1} parent=1 // loop_footer_branch
      %38 = sbr.rel target = $region3
    $region8: #{tpu_custom_call.1} parent=1 // loop_exit
      _
    %1799 = vsyncpa [#allocation4], 1
    %s1800 = scalar_lea.sflag [#allocation4], 1
    %1801 = vsyncpa %s1800, 1
    %1802 = vsyncpa [#allocation7], 1
    %s1803 = scalar_lea.sflag [#allocation7], 1
    %1804 = vsyncpa %s1803, 1
    %1805 = vsyncpa [#allocation10], 1
    %s1806 = scalar_lea.sflag [#allocation10], 1
    %1807 = vsyncpa %s1806, 1
    %1808 = vsyncpa [#allocation13], 1
    %s1809 = scalar_lea.sflag [#allocation13], 1
    %1810 = vsyncpa %s1809, 1
    %1811 = vsyncpa [#allocation16], 1
    %s1812 = scalar_lea.sflag [#allocation16], 1
    %1813 = vsyncpa %s1812, 1
    %1814 = vsyncpa [#allocation5], 1
    %s1815 = scalar_lea.sflag [#allocation5], 1
    %1816 = vsyncpa %s1815, 1

</llo_original>
